<compile_context>
chip_gen: v6e
topology: v6e:2x2x1
jax: 0.10.0
libtpu: 0.0.40
codegen_flags: <defaults>
</compile_context>

<pallas_src>
import functools

import jax
import jax.numpy as jnp
from jax import lax
from jax.experimental import pallas as pl
from jax.experimental.pallas import tpu as pltpu


def _round_up(x, m):
    return ((x + m - 1) // m) * m


# Contract dim 1 of LHS with dim 1 of RHS:  (m, k) x (n, k) -> (m, n).
_NT_DIMS = (((1,), (1,)), ((), ()))


def _tensorcores_per_chip():
    """Best-effort TC-per-chip count (tiling hint only, never correctness)."""
    try:
        kind = jax.devices()[0].device_kind.lower()
    except Exception:  # pragma: no cover - defensive
        return 1
    # v4 / v5p (megacore) and v7x expose 2 TensorCores per chip.
    if "v4" in kind or "v5p" in kind or "7" in kind:
        return 2
    return 1


def _choose_tile(batch, max_tile):
    """Pick (bt, nt): bt a multiple of 128, grid = (nt,) covers `batch` rows."""
    b128 = _round_up(batch, 128)
    max_tile = max(128, _round_up(max_tile, 128))
    if _tensorcores_per_chip() >= 2 and b128 >= 256:
        # Keep >= 2 tiles so the "parallel" axis shards across both TCs.
        bt = min(max_tile, _round_up(pl.cdiv(b128, 2), 128))
    else:
        # Single TC: one big tile if it fits the cap (each extra grid step is
        # ~0.35 us of pure overhead on a ~100 KiB problem).
        bt = min(max_tile, b128)
    nt = pl.cdiv(batch, bt)
    return bt, nt


def _vmem_estimate_bytes(bt, in_dim, h1, h2):
    """Rough VMEM budget for one grid step (double-buffered I/O + temps)."""
    in_pad = _round_up(in_dim, 128)
    h1_pad = _round_up(h1, 128)
    x_blk = 2 * bt * in_pad * 2                 # bf16 x tile, 2 buffers
    o_blk = 2 * bt * 4                          # f32 (1,1,bt) out tile, 2 buffers
    acts = bt * (h1 + h2) * 4 + bt * h1 * 2     # f32 h1/h2 + bf16 h1 copy
    wts = (h1 * in_pad + h2 * h1_pad) * 2 + (h1 + 2 * h2) * 128 * 4
    return x_blk + o_blk + acts + wts


def _mlp_kernel(x_ref, w1_ref, b1_ref, w2_ref, b2_ref, w3_ref, b3_ref, o_ref):
    """Fused (Linear->ReLU) x2 -> Linear -> Sigmoid on one batch tile.

    In-kernel shapes (bt = batch tile):
      x_ref : (bt, in)  bf16           w1_ref: (h1, in) bf16   b1_ref: (h1, 1) f32
      w2_ref: (h2, h1)  bf16           b2_ref: (h2, 1) f32
      w3_ref: (h2, 1)   f32            b3_ref: (1,) f32 SMEM scalar
      o_ref : (1, 1, bt) f32  (batch on the lane axis -> lane-dense store)
    """
    x = x_ref[...]                                          # (bt, in) bf16

    # Layer 1: Linear + ReLU   (Dropout -> identity in eval mode)
    # NT matmul: (h1, in) x (bt, in) -> (h1, bt); bf16 MXU pass, f32 accum.
    a1 = lax.dot_general(w1_ref[...], x, _NT_DIMS,
                         preferred_element_type=jnp.float32)
    a1 = jnp.maximum(a1 + b1_ref[...], 0.0)                 # (h1, bt) f32

    # Layer 2: Linear + ReLU   (Dropout -> identity in eval mode)
    a2 = jnp.dot(w2_ref[...], a1.astype(jnp.bfloat16),
                 preferred_element_type=jnp.float32)
    a2 = jnp.maximum(a2 + b2_ref[...], 0.0)                 # (h2, bt) f32

    # Layer 3: 1-wide Linear as VPU multiply + sublane reduce, then Sigmoid.
    logits = jnp.sum(a2 * w3_ref[...], axis=0, keepdims=True) + b3_ref[0]
    out = jax.nn.sigmoid(logits)                            # (1, bt) lane-dense
    o_ref[...] = out.reshape(o_ref.shape).astype(o_ref.dtype)


@functools.partial(jax.jit, static_argnames=("batch_tile",))
def churn_predict_mlp(x, params, *, batch_tile=4096):
    """Forward pass of ChurnPredictMLP.

    Args:
      x: [B, input_size] float32 or bfloat16 (bf16 callers skip the convert;
         the kernel streams x from HBM as bf16 either way).
      params: dict of PyTorch-layout parameters:
        w1 [h1, in], b1 [h1, 1], w2 [h2, h1], b2 [h2, 1], w3 [h2, 1], b3 [1].
      batch_tile: upper bound on rows per grid step (rounded to 128).
    Returns:
      [B, 1] float32 sigmoid probabilities.
    """
    B, in_dim = x.shape
    h1 = params["w1"].shape[0]
    h2 = params["w2"].shape[0]

    bt, nt = _choose_tile(B, batch_tile)

    # Dominant HBM stream (x) and both MXU operands in bf16; accumulation,
    # biases and the output head stay f32.
    x_bf = x.astype(jnp.bfloat16)
    w1_bf = params["w1"].astype(jnp.bfloat16)
    w2_bf = params["w2"].astype(jnp.bfloat16)

    cp_kwargs = dict(dimension_semantics=("parallel",))
    vmem_est = _vmem_estimate_bytes(bt, in_dim, h1, h2)
    if vmem_est > (12 << 20):
        # Only needed for very large user-supplied tiles; stay well under the
        # v7x 64 MiB physical VMEM.
        cp_kwargs["vmem_limit_bytes"] = int(min(48 << 20, 2 * vmem_est))

    # Small weights/biases: one full-array block, resident across all steps.
    full2d = lambda shape: pl.BlockSpec(shape, lambda i: (0, 0))

    # NOTE: grid = cdiv(B, bt) may not divide B: Pallas clamps the boundary
    # DMA; the undefined rows of the last x tile only influence output rows
    # >= B, which are sliced off below.  (Each batch row is independent:
    # batch is a non-contracted dim of both matmuls.)
    out = pl.pallas_call(
        _mlp_kernel,
        out_shape=jax.ShapeDtypeStruct((nt, 1, bt), jnp.float32),
        grid=(nt,),
        in_specs=[
            pl.BlockSpec((bt, in_dim), lambda i: (i, 0)),        # x tile
            full2d((h1, in_dim)),                                # w1 (bf16)
            full2d((h1, 1)),                                     # b1 (f32)
            full2d((h2, h1)),                                    # w2 (bf16)
            full2d((h2, 1)),                                     # b2 (f32)
            full2d((h2, 1)),                                     # w3 (f32)
            pl.BlockSpec(memory_space=pltpu.MemorySpace.SMEM),   # b3 scalar
        ],
        out_specs=pl.BlockSpec((1, 1, bt), lambda i: (i, 0, 0)),
        compiler_params=pltpu.CompilerParams(**cp_kwargs),
    )(x_bf, w1_bf, params["b1"], w2_bf, params["b2"],
      params["w3"], params["b3"])

    return out.reshape(nt * bt, 1)[:B]


def init_params(key, input_size, hidden_size1, hidden_size2):
    """PyTorch nn.Linear default init (U[-1/sqrt(fan_in), 1/sqrt(fan_in)])."""
    ks = jax.random.split(key, 6)

    def lin(kw, kb, fan_in, fan_out):
        bound = 1.0 / float(fan_in) ** 0.5
        w = jax.random.uniform(kw, (fan_out, fan_in), jnp.float32, -bound, bound)
        b = jax.random.uniform(kb, (fan_out, 1), jnp.float32, -bound, bound)
        return w, b

    w1, b1 = lin(ks[0], ks[1], input_size, hidden_size1)
    w2, b2 = lin(ks[2], ks[3], hidden_size1, hidden_size2)
    w3_pt, b3_pt = lin(ks[4], ks[5], hidden_size2, 1)   # w3_pt: (1, h2)
    return dict(w1=w1, b1=b1, w2=w2, b2=b2,
                w3=w3_pt.T,                 # stored as (h2, 1) column
                b3=b3_pt.reshape(1))


def _reference(x_f32, p, *, match_kernel_quant):
    """Plain-JAX reference (eval-mode dropout).

    With match_kernel_quant=True it mirrors the kernel's numerics exactly
    (bf16 x / w1 / w2 / h1, f32 accumulation, f32 biases and output head).
    """
    hp = lax.Precision.HIGHEST

    def q(a):
        return a.astype(jnp.bfloat16).astype(jnp.float32) if match_kernel_quant else a

    xq, w1, w2 = q(x_f32), q(p["w1"]), q(p["w2"])
    a1 = jnp.maximum(jnp.dot(xq, w1.T, precision=hp) + p["b1"].T, 0.0)
    a1 = q(a1)
    a2 = jnp.maximum(jnp.dot(a1, w2.T, precision=hp) + p["b2"].T, 0.0)
    logits = jnp.dot(a2, p["w3"], precision=hp) + p["b3"]
    return jax.nn.sigmoid(logits)


if __name__ == "__main__":
    key = jax.random.PRNGKey(0)
    k_x, k_p = jax.random.split(key)

    batch = 2000          # deliberately NOT a multiple of 128 / the batch tile
    input_size = 32
    hidden_size1 = 64
    hidden_size2 = 32

    params = init_params(k_p, input_size, hidden_size1, hidden_size2)
    x = jax.random.normal(k_x, (batch, input_size), jnp.float32)

    out = churn_predict_mlp(x, params)
    out = jax.block_until_ready(out)
    assert out.shape == (batch, 1), out.shape

    # Tight check against a reference that mirrors the kernel's bf16/f32 mix.
    ref_q = _reference(x, params, match_kernel_quant=True)
    err_q = float(jnp.max(jnp.abs(out - ref_q)))
    assert jnp.allclose(out, ref_q, atol=2e-3, rtol=2e-3), f"max err {err_q}"

    # Looser sanity check against the full-f32 PyTorch-equivalent forward
    # (difference = bf16 quantization of x / w1 / w2 / h1 only).
    ref_f32 = _reference(x, params, match_kernel_quant=False)
    err_f = float(jnp.max(jnp.abs(out - ref_f32)))
    assert jnp.allclose(out, ref_f32, atol=2e-2, rtol=2e-2), f"max err {err_f}"

    print("KERNEL_OK")
</pallas_src>

<mosaic_0001>
module attributes {stable_mosaic.version = 11 : i64} {
  func.func @_mlp_kernel(%arg0: i32, %arg1: memref<2048x32xbf16, #tpu.memory_space<vmem>>, %arg2: memref<64x32xbf16, #tpu.memory_space<vmem>>, %arg3: memref<64x1xf32, #tpu.memory_space<vmem>>, %arg4: memref<32x64xbf16, #tpu.memory_space<vmem>>, %arg5: memref<32x1xf32, #tpu.memory_space<vmem>>, %arg6: memref<32x1xf32, #tpu.memory_space<vmem>>, %arg7: memref<1xf32, #tpu.memory_space<smem>>, %arg8: memref<1x1x2048xf32, #tpu.memory_space<vmem>>) attributes {dimension_semantics = [#tpu.dimension_semantics<parallel>], iteration_bounds = array<i64: 1>, scalar_prefetch = 0 : i64, scratch_operands = 0 : i64, tpu.core_type = #tpu.core_type<tc>, window_params = [{transform_indices = @transform_0, window_bounds = array<i64: 2048, 32>}, {pipeline_mode = #tpu.pipeline_mode<synchronous>, transform_indices = @transform_1, window_bounds = array<i64: 64, 32>}, {pipeline_mode = #tpu.pipeline_mode<synchronous>, transform_indices = @transform_2, window_bounds = array<i64: 64, 1>}, {pipeline_mode = #tpu.pipeline_mode<synchronous>, transform_indices = @transform_3, window_bounds = array<i64: 32, 64>}, {pipeline_mode = #tpu.pipeline_mode<synchronous>, transform_indices = @transform_4, window_bounds = array<i64: 32, 1>}, {pipeline_mode = #tpu.pipeline_mode<synchronous>, transform_indices = @transform_5, window_bounds = array<i64: 32, 1>}, {transform_indices = @transform_6, window_bounds = array<i64: 1>}, {transform_indices = @transform_7, window_bounds = array<i64: 1, 1, 2048>}]} {
    %c0 = arith.constant 0 : index
    %c0_0 = arith.constant 0 : index
    %0 = vector.load %arg1[%c0, %c0_0] : memref<2048x32xbf16, #tpu.memory_space<vmem>>, vector<2048x32xbf16>
    %c0_1 = arith.constant 0 : index
    %c0_2 = arith.constant 0 : index
    %1 = vector.load %arg2[%c0_1, %c0_2] : memref<64x32xbf16, #tpu.memory_space<vmem>>, vector<64x32xbf16>
    %cst = arith.constant dense<0.000000e+00> : vector<64x2048xf32>
    %2 = tpu.matmul %1, %0, %cst {dimension_numbers = #tpu.dot_dimension_numbers<[1], [1], [0], [0], [0, 0, 1, 0], [], []>} : vector<64x32xbf16>, vector<2048x32xbf16>, vector<64x2048xf32> -> vector<64x2048xf32>
    %c0_3 = arith.constant 0 : index
    %c0_4 = arith.constant 0 : index
    %3 = vector.load %arg3[%c0_3, %c0_4] : memref<64x1xf32, #tpu.memory_space<vmem>>, vector<64x1xf32>
    %4 = vector.broadcast %3 : vector<64x1xf32> to vector<64x2048xf32>
    %5 = arith.addf %2, %4 : vector<64x2048xf32>
    %cst_5 = arith.constant 0.000000e+00 : f32
    %6 = vector.broadcast %cst_5 : f32 to vector<64x2048xf32>
    %7 = arith.maximumf %5, %6 : vector<64x2048xf32>
    %c0_6 = arith.constant 0 : index
    %c0_7 = arith.constant 0 : index
    %8 = vector.load %arg4[%c0_6, %c0_7] : memref<32x64xbf16, #tpu.memory_space<vmem>>, vector<32x64xbf16>
    %9 = arith.truncf %7 : vector<64x2048xf32> to vector<64x2048xbf16>
    %cst_8 = arith.constant dense<0.000000e+00> : vector<32x2048xf32>
    %10 = tpu.matmul %8, %9, %cst_8 {dimension_numbers = #tpu.dot_dimension_numbers<[1], [0], [0], [1], [0, 0, 1, 1], [], []>} : vector<32x64xbf16>, vector<64x2048xbf16>, vector<32x2048xf32> -> vector<32x2048xf32>
    %c0_9 = arith.constant 0 : index
    %c0_10 = arith.constant 0 : index
    %11 = vector.load %arg5[%c0_9, %c0_10] : memref<32x1xf32, #tpu.memory_space<vmem>>, vector<32x1xf32>
    %12 = vector.broadcast %11 : vector<32x1xf32> to vector<32x2048xf32>
    %13 = arith.addf %10, %12 : vector<32x2048xf32>
    %cst_11 = arith.constant 0.000000e+00 : f32
    %14 = vector.broadcast %cst_11 : f32 to vector<32x2048xf32>
    %15 = arith.maximumf %13, %14 : vector<32x2048xf32>
    %c0_12 = arith.constant 0 : index
    %c0_13 = arith.constant 0 : index
    %16 = vector.load %arg6[%c0_12, %c0_13] : memref<32x1xf32, #tpu.memory_space<vmem>>, vector<32x1xf32>
    %17 = vector.broadcast %16 : vector<32x1xf32> to vector<32x2048xf32>
    %18 = arith.mulf %15, %17 : vector<32x2048xf32>
    %cst_14 = arith.constant dense<0.000000e+00> : vector<2048xf32>
    %19 = vector.multi_reduction <add>, %18, %cst_14 [0] : vector<32x2048xf32> to vector<2048xf32>
    %20 = vector.shape_cast %19 : vector<2048xf32> to vector<1x2048xf32>
    %c0_15 = arith.constant 0 : index
    %21 = memref.load %arg7[%c0_15] : memref<1xf32, #tpu.memory_space<smem>>
    %22 = vector.broadcast %21 : f32 to vector<1x2048xf32>
    %23 = arith.addf %20, %22 : vector<1x2048xf32>
    %24 = arith.negf %23 : vector<1x2048xf32>
    %25 = math.exp %24 : vector<1x2048xf32>
    %cst_16 = arith.constant 1.000000e+00 : f32
    %26 = vector.broadcast %cst_16 : f32 to vector<1x2048xf32>
    %27 = arith.addf %26, %25 : vector<1x2048xf32>
    %28 = arith.divf %26, %27 : vector<1x2048xf32>
    %29 = vector.shape_cast %28 : vector<1x2048xf32> to vector<1x1x2048xf32>
    %c0_17 = arith.constant 0 : index
    %c0_18 = arith.constant 0 : index
    %c0_19 = arith.constant 0 : index
    %30 = vector.load %arg8[%c0_17, %c0_18, %c0_19] : memref<1x1x2048xf32, #tpu.memory_space<vmem>>, vector<1x1x2048xf32>
    tpu.vector_store %arg8[%c0_17, %c0_18, %c0_19], %29 {strides = array<i32>} : memref<1x1x2048xf32, #tpu.memory_space<vmem>>, vector<1x1x2048xf32>,
    return
  }
  func.func @transform_0(%arg0: i32) -> (i32, i32) {
    %c0_i32 = arith.constant 0 : i32
    %c0_i32_0 = arith.constant 0 : i32
    return %arg0, %c0_i32 : i32, i32
  }
  func.func @transform_1(%arg0: i32) -> (i32, i32) {
    %c0_i32 = arith.constant 0 : i32
    %c0_i32_0 = arith.constant 0 : i32
    %c0_i32_1 = arith.constant 0 : i32
    return %c0_i32, %c0_i32_0 : i32, i32
  }
  func.func @transform_2(%arg0: i32) -> (i32, i32) {
    %c0_i32 = arith.constant 0 : i32
    %c0_i32_0 = arith.constant 0 : i32
    %c0_i32_1 = arith.constant 0 : i32
    return %c0_i32, %c0_i32_0 : i32, i32
  }
  func.func @transform_3(%arg0: i32) -> (i32, i32) {
    %c0_i32 = arith.constant 0 : i32
    %c0_i32_0 = arith.constant 0 : i32
    %c0_i32_1 = arith.constant 0 : i32
    return %c0_i32, %c0_i32_0 : i32, i32
  }
  func.func @transform_4(%arg0: i32) -> (i32, i32) {
    %c0_i32 = arith.constant 0 : i32
    %c0_i32_0 = arith.constant 0 : i32
    %c0_i32_1 = arith.constant 0 : i32
    return %c0_i32, %c0_i32_0 : i32, i32
  }
  func.func @transform_5(%arg0: i32) -> (i32, i32) {
    %c0_i32 = arith.constant 0 : i32
    %c0_i32_0 = arith.constant 0 : i32
    %c0_i32_1 = arith.constant 0 : i32
    return %c0_i32, %c0_i32_0 : i32, i32
  }
  func.func @transform_6(%arg0: i32) -> i32 {
    %c0_i32 = arith.constant 0 : i32
    %c0_i32_0 = arith.constant 0 : i32
    return %c0_i32 : i32
  }
  func.func @transform_7(%arg0: i32) -> (i32, i32, i32) {
    %c0_i32 = arith.constant 0 : i32
    %c0_i32_0 = arith.constant 0 : i32
    %c0_i32_1 = arith.constant 0 : i32
    return %arg0, %c0_i32, %c0_i32_0 : i32, i32, i32
  }
}

</mosaic_0001>

<llo_original>
// kernel: churn_predict_mlp.1
$region0: #{churn_predict_mlp.1}
  #allocation0 [shape = 'u32[]', space=smem, size = 0x4, offset = 0x4, fixed_abs, tag = 'smem constant byte address 0x4 - core index']
  #allocation1 [shape = 'u32[144,128]{1,0:T(1,128)}', space=vmem, size = 0x12000, scoped, tag = 'internal scratch']
  #allocation2 [shape = 'f32[1]{0:T(128)S(6)}', space=smem, size = 0x200, scoped, tag = 'scoped memory for churn_predict_mlp.1']
  %s0 = inlined_call_operand.vmem [shape: bf16[2000,32], index: 0, kind: input, shape index: {}]
  %s1 = inlined_call_operand.vmem [shape: bf16[64,32], index: 1, kind: input, shape index: {}]
  %s2 = inlined_call_operand.vmem [shape: f32[64,1], index: 2, kind: input, shape index: {}]
  %s3 = inlined_call_operand.vmem [shape: bf16[32,64], index: 3, kind: input, shape index: {}]
  %s4 = inlined_call_operand.vmem [shape: f32[32,1], index: 4, kind: input, shape index: {}]
  %s5 = inlined_call_operand.vmem [shape: f32[32,1], index: 5, kind: input, shape index: {}]
  %s6 = inlined_call_operand.<no memory space> [shape: f32[1], index: 6, kind: input, shape index: {}]
  %s7 = inlined_call_operand.vmem [shape: f32[1,1,2048], index: 7, kind: output, shape index: {}]
  %s8 = sld [smem:[#allocation0]]
  $region38: #{churn_predict_mlp.1} parent=0
    _
  %s10 = ssub.s32 1, %s8
  %s11 = scalar_select 0, %s10, %s8
  %12 = sst [smem:[#allocation2]] %s6
  // Predicated region
  $region2: #{churn_predict_mlp.1} parent=0 // pred_check
    _
  $region3: #{churn_predict_mlp.1} parent=0 // pred_check_branch
    %14 = sbr.rel (0) target = $region5
  $region4: #{churn_predict_mlp.1} parent=0 // pred_region
    _
  $region5: #{churn_predict_mlp.1} parent=0 // pred_fallthru
    _
  // Predicated region
  $region6: #{churn_predict_mlp.1} parent=0 // pred_check
    _
  $region7: #{churn_predict_mlp.1} parent=0 // pred_check_branch
    %16 = sbr.rel (0) target = $region9
  $region8: #{churn_predict_mlp.1} parent=0 // pred_region
    _
  $region9: #{churn_predict_mlp.1} parent=0 // pred_fallthru
    _
  // Predicated region
  $region10: #{churn_predict_mlp.1} parent=0 // pred_check
    _
  $region11: #{churn_predict_mlp.1} parent=0 // pred_check_branch
    %18 = sbr.rel (0) target = $region13
  $region12: #{churn_predict_mlp.1} parent=0 // pred_region
    _
  $region13: #{churn_predict_mlp.1} parent=0 // pred_fallthru
    _
  // Predicated region
  $region14: #{churn_predict_mlp.1} parent=0 // pred_check
    _
  $region15: #{churn_predict_mlp.1} parent=0 // pred_check_branch
    %20 = sbr.rel (0) target = $region17
  $region16: #{churn_predict_mlp.1} parent=0 // pred_region
    _
  $region17: #{churn_predict_mlp.1} parent=0 // pred_fallthru
    _
  // Predicated region
  $region18: #{churn_predict_mlp.1} parent=0 // pred_check
    _
  $region19: #{churn_predict_mlp.1} parent=0 // pred_check_branch
    %22 = sbr.rel (0) target = $region21
  $region20: #{churn_predict_mlp.1} parent=0 // pred_region
    _
  $region21: #{churn_predict_mlp.1} parent=0 // pred_fallthru
    _
  // Predicated region
  $region22: #{churn_predict_mlp.1} parent=0 // pred_check
    _
  $region23: #{churn_predict_mlp.1} parent=0 // pred_check_branch
    %24 = sbr.rel (0) target = $region25
  $region24: #{churn_predict_mlp.1} parent=0 // pred_region
    _
  $region25: #{churn_predict_mlp.1} parent=0 // pred_fallthru
    _
  // Predicated region
  $region26: #{churn_predict_mlp.1} parent=0 // pred_check
    _
  $region27: #{churn_predict_mlp.1} parent=0 // pred_check_branch
    %26 = sbr.rel (0) target = $region29
  $region28: #{churn_predict_mlp.1} parent=0 // pred_region
    _
  $region29: #{churn_predict_mlp.1} parent=0 // pred_fallthru
    _
  %v28 = vld [vmem:[%s0] sm:$0xf]
  %v29 = vld [vmem:[%s0 + $0x4] sm:$0xf]
  %v30 = vld [vmem:[%s0 + $0x8] sm:$0xf]
  %v31 = vld [vmem:[%s0 + $0xc] sm:$0xf]
  %v32 = vld [vmem:[%s0 + $0x10] sm:$0xf]
  %v33 = vld [vmem:[%s0 + $0x14] sm:$0xf]
  %v34 = vld [vmem:[%s0 + $0x18] sm:$0xf]
  %v35 = vld [vmem:[%s0 + $0x1c] sm:$0xf]
  %v36 = vld [vmem:[%s0 + $0x20] sm:$0xf]
  %v37 = vld [vmem:[%s0 + $0x24] sm:$0xf]
  %v38 = vld [vmem:[%s0 + $0x28] sm:$0xf]
  %v39 = vld [vmem:[%s0 + $0x2c] sm:$0xf]
  %v40 = vld [vmem:[%s0 + $0x30] sm:$0xf]
  %v41 = vld [vmem:[%s0 + $0x34] sm:$0xf]
  %v42 = vld [vmem:[%s0 + $0x38] sm:$0xf]
  %v43 = vld [vmem:[%s0 + $0x3c] sm:$0xf]
  %v44 = vld [vmem:[%s0 + $0x40] sm:$0xf]
  %v45 = vld [vmem:[%s0 + $0x44] sm:$0xf]
  %v46 = vld [vmem:[%s0 + $0x48] sm:$0xf]
  %v47 = vld [vmem:[%s0 + $0x4c] sm:$0xf]
  %v48 = vld [vmem:[%s0 + $0x50] sm:$0xf]
  %v49 = vld [vmem:[%s0 + $0x54] sm:$0xf]
  %v50 = vld [vmem:[%s0 + $0x58] sm:$0xf]
  %v51 = vld [vmem:[%s0 + $0x5c] sm:$0xf]
  %v52 = vld [vmem:[%s0 + $0x60] sm:$0xf]
  %v53 = vld [vmem:[%s0 + $0x64] sm:$0xf]
  %v54 = vld [vmem:[%s0 + $0x68] sm:$0xf]
  %v55 = vld [vmem:[%s0 + $0x6c] sm:$0xf]
  %v56 = vld [vmem:[%s0 + $0x70] sm:$0xf]
  %v57 = vld [vmem:[%s0 + $0x74] sm:$0xf]
  %v58 = vld [vmem:[%s0 + $0x78] sm:$0xf]
  %v59 = vld [vmem:[%s0 + $0x7c] sm:$0xf]
  %v60 = vld [vmem:[%s0 + $0x80] sm:$0xf]
  %v61 = vld [vmem:[%s0 + $0x84] sm:$0xf]
  %v62 = vld [vmem:[%s0 + $0x88] sm:$0xf]
  %v63 = vld [vmem:[%s0 + $0x8c] sm:$0xf]
  %v64 = vld [vmem:[%s0 + $0x90] sm:$0xf]
  %v65 = vld [vmem:[%s0 + $0x94] sm:$0xf]
  %v66 = vld [vmem:[%s0 + $0x98] sm:$0xf]
  %v67 = vld [vmem:[%s0 + $0x9c] sm:$0xf]
  %v68 = vld [vmem:[%s0 + $0xa0] sm:$0xf]
  %v69 = vld [vmem:[%s0 + $0xa4] sm:$0xf]
  %v70 = vld [vmem:[%s0 + $0xa8] sm:$0xf]
  %v71 = vld [vmem:[%s0 + $0xac] sm:$0xf]
  %v72 = vld [vmem:[%s0 + $0xb0] sm:$0xf]
  %v73 = vld [vmem:[%s0 + $0xb4] sm:$0xf]
  %v74 = vld [vmem:[%s0 + $0xb8] sm:$0xf]
  %v75 = vld [vmem:[%s0 + $0xbc] sm:$0xf]
  %v76 = vld [vmem:[%s0 + $0xc0] sm:$0xf]
  %v77 = vld [vmem:[%s0 + $0xc4] sm:$0xf]
  %v78 = vld [vmem:[%s0 + $0xc8] sm:$0xf]
  %v79 = vld [vmem:[%s0 + $0xcc] sm:$0xf]
  %v80 = vld [vmem:[%s0 + $0xd0] sm:$0xf]
  %v81 = vld [vmem:[%s0 + $0xd4] sm:$0xf]
  %v82 = vld [vmem:[%s0 + $0xd8] sm:$0xf]
  %v83 = vld [vmem:[%s0 + $0xdc] sm:$0xf]
  %v84 = vld [vmem:[%s0 + $0xe0] sm:$0xf]
  %v85 = vld [vmem:[%s0 + $0xe4] sm:$0xf]
  %v86 = vld [vmem:[%s0 + $0xe8] sm:$0xf]
  %v87 = vld [vmem:[%s0 + $0xec] sm:$0xf]
  %v88 = vld [vmem:[%s0 + $0xf0] sm:$0xf]
  %v89 = vld [vmem:[%s0 + $0xf4] sm:$0xf]
  %v90 = vld [vmem:[%s0 + $0xf8] sm:$0xf]
  %v91 = vld [vmem:[%s0 + $0xfc] sm:$0xf]
  %v92 = vld [vmem:[%s0 + $0x100] sm:$0xf]
  %v93 = vld [vmem:[%s0 + $0x104] sm:$0xf]
  %v94 = vld [vmem:[%s0 + $0x108] sm:$0xf]
  %v95 = vld [vmem:[%s0 + $0x10c] sm:$0xf]
  %v96 = vld [vmem:[%s0 + $0x110] sm:$0xf]
  %v97 = vld [vmem:[%s0 + $0x114] sm:$0xf]
  %v98 = vld [vmem:[%s0 + $0x118] sm:$0xf]
  %v99 = vld [vmem:[%s0 + $0x11c] sm:$0xf]
  %v100 = vld [vmem:[%s0 + $0x120] sm:$0xf]
  %v101 = vld [vmem:[%s0 + $0x124] sm:$0xf]
  %v102 = vld [vmem:[%s0 + $0x128] sm:$0xf]
  %v103 = vld [vmem:[%s0 + $0x12c] sm:$0xf]
  %v104 = vld [vmem:[%s0 + $0x130] sm:$0xf]
  %v105 = vld [vmem:[%s0 + $0x134] sm:$0xf]
  %v106 = vld [vmem:[%s0 + $0x138] sm:$0xf]
  %v107 = vld [vmem:[%s0 + $0x13c] sm:$0xf]
  %v108 = vld [vmem:[%s0 + $0x140] sm:$0xf]
  %v109 = vld [vmem:[%s0 + $0x144] sm:$0xf]
  %v110 = vld [vmem:[%s0 + $0x148] sm:$0xf]
  %v111 = vld [vmem:[%s0 + $0x14c] sm:$0xf]
  %v112 = vld [vmem:[%s0 + $0x150] sm:$0xf]
  %v113 = vld [vmem:[%s0 + $0x154] sm:$0xf]
  %v114 = vld [vmem:[%s0 + $0x158] sm:$0xf]
  %v115 = vld [vmem:[%s0 + $0x15c] sm:$0xf]
  %v116 = vld [vmem:[%s0 + $0x160] sm:$0xf]
  %v117 = vld [vmem:[%s0 + $0x164] sm:$0xf]
  %v118 = vld [vmem:[%s0 + $0x168] sm:$0xf]
  %v119 = vld [vmem:[%s0 + $0x16c] sm:$0xf]
  %v120 = vld [vmem:[%s0 + $0x170] sm:$0xf]
  %v121 = vld [vmem:[%s0 + $0x174] sm:$0xf]
  %v122 = vld [vmem:[%s0 + $0x178] sm:$0xf]
  %v123 = vld [vmem:[%s0 + $0x17c] sm:$0xf]
  %v124 = vld [vmem:[%s0 + $0x180] sm:$0xf]
  %v125 = vld [vmem:[%s0 + $0x184] sm:$0xf]
  %v126 = vld [vmem:[%s0 + $0x188] sm:$0xf]
  %v127 = vld [vmem:[%s0 + $0x18c] sm:$0xf]
  %v128 = vld [vmem:[%s0 + $0x190] sm:$0xf]
  %v129 = vld [vmem:[%s0 + $0x194] sm:$0xf]
  %v130 = vld [vmem:[%s0 + $0x198] sm:$0xf]
  %v131 = vld [vmem:[%s0 + $0x19c] sm:$0xf]
  %v132 = vld [vmem:[%s0 + $0x1a0] sm:$0xf]
  %v133 = vld [vmem:[%s0 + $0x1a4] sm:$0xf]
  %v134 = vld [vmem:[%s0 + $0x1a8] sm:$0xf]
  %v135 = vld [vmem:[%s0 + $0x1ac] sm:$0xf]
  %v136 = vld [vmem:[%s0 + $0x1b0] sm:$0xf]
  %v137 = vld [vmem:[%s0 + $0x1b4] sm:$0xf]
  %v138 = vld [vmem:[%s0 + $0x1b8] sm:$0xf]
  %v139 = vld [vmem:[%s0 + $0x1bc] sm:$0xf]
  %v140 = vld [vmem:[%s0 + $0x1c0] sm:$0xf]
  %v141 = vld [vmem:[%s0 + $0x1c4] sm:$0xf]
  %v142 = vld [vmem:[%s0 + $0x1c8] sm:$0xf]
  %v143 = vld [vmem:[%s0 + $0x1cc] sm:$0xf]
  %v144 = vld [vmem:[%s0 + $0x1d0] sm:$0xf]
  %v145 = vld [vmem:[%s0 + $0x1d4] sm:$0xf]
  %v146 = vld [vmem:[%s0 + $0x1d8] sm:$0xf]
  %v147 = vld [vmem:[%s0 + $0x1dc] sm:$0xf]
  %v148 = vld [vmem:[%s0 + $0x1e0] sm:$0xf]
  %v149 = vld [vmem:[%s0 + $0x1e4] sm:$0xf]
  %v150 = vld [vmem:[%s0 + $0x1e8] sm:$0xf]
  %v151 = vld [vmem:[%s0 + $0x1ec] sm:$0xf]
  %v152 = vld [vmem:[%s0 + $0x1f0] sm:$0xf]
  %v153 = vld [vmem:[%s0 + $0x1f4] sm:$0xf]
  %v154 = vld [vmem:[%s0 + $0x1f8] sm:$0xf]
  %v155 = vld [vmem:[%s0 + $0x1fc] sm:$0xf]
  %v156 = vld [vmem:[%s0 + $0x200] sm:$0xf]
  %v157 = vld [vmem:[%s0 + $0x204] sm:$0xf]
  %v158 = vld [vmem:[%s0 + $0x208] sm:$0xf]
  %v159 = vld [vmem:[%s0 + $0x20c] sm:$0xf]
  %v160 = vld [vmem:[%s0 + $0x210] sm:$0xf]
  %v161 = vld [vmem:[%s0 + $0x214] sm:$0xf]
  %v162 = vld [vmem:[%s0 + $0x218] sm:$0xf]
  %v163 = vld [vmem:[%s0 + $0x21c] sm:$0xf]
  %v164 = vld [vmem:[%s0 + $0x220] sm:$0xf]
  %v165 = vld [vmem:[%s0 + $0x224] sm:$0xf]
  %v166 = vld [vmem:[%s0 + $0x228] sm:$0xf]
  %v167 = vld [vmem:[%s0 + $0x22c] sm:$0xf]
  %v168 = vld [vmem:[%s0 + $0x230] sm:$0xf]
  %v169 = vld [vmem:[%s0 + $0x234] sm:$0xf]
  %v170 = vld [vmem:[%s0 + $0x238] sm:$0xf]
  %v171 = vld [vmem:[%s0 + $0x23c] sm:$0xf]
  %v172 = vld [vmem:[%s0 + $0x240] sm:$0xf]
  %v173 = vld [vmem:[%s0 + $0x244] sm:$0xf]
  %v174 = vld [vmem:[%s0 + $0x248] sm:$0xf]
  %v175 = vld [vmem:[%s0 + $0x24c] sm:$0xf]
  %v176 = vld [vmem:[%s0 + $0x250] sm:$0xf]
  %v177 = vld [vmem:[%s0 + $0x254] sm:$0xf]
  %v178 = vld [vmem:[%s0 + $0x258] sm:$0xf]
  %v179 = vld [vmem:[%s0 + $0x25c] sm:$0xf]
  %v180 = vld [vmem:[%s0 + $0x260] sm:$0xf]
  %v181 = vld [vmem:[%s0 + $0x264] sm:$0xf]
  %v182 = vld [vmem:[%s0 + $0x268] sm:$0xf]
  %v183 = vld [vmem:[%s0 + $0x26c] sm:$0xf]
  %v184 = vld [vmem:[%s0 + $0x270] sm:$0xf]
  %v185 = vld [vmem:[%s0 + $0x274] sm:$0xf]
  %v186 = vld [vmem:[%s0 + $0x278] sm:$0xf]
  %v187 = vld [vmem:[%s0 + $0x27c] sm:$0xf]
  %v188 = vld [vmem:[%s0 + $0x280] sm:$0xf]
  %v189 = vld [vmem:[%s0 + $0x284] sm:$0xf]
  %v190 = vld [vmem:[%s0 + $0x288] sm:$0xf]
  %v191 = vld [vmem:[%s0 + $0x28c] sm:$0xf]
  %v192 = vld [vmem:[%s0 + $0x290] sm:$0xf]
  %v193 = vld [vmem:[%s0 + $0x294] sm:$0xf]
  %v194 = vld [vmem:[%s0 + $0x298] sm:$0xf]
  %v195 = vld [vmem:[%s0 + $0x29c] sm:$0xf]
  %v196 = vld [vmem:[%s0 + $0x2a0] sm:$0xf]
  %v197 = vld [vmem:[%s0 + $0x2a4] sm:$0xf]
  %v198 = vld [vmem:[%s0 + $0x2a8] sm:$0xf]
  %v199 = vld [vmem:[%s0 + $0x2ac] sm:$0xf]
  %v200 = vld [vmem:[%s0 + $0x2b0] sm:$0xf]
  %v201 = vld [vmem:[%s0 + $0x2b4] sm:$0xf]
  %v202 = vld [vmem:[%s0 + $0x2b8] sm:$0xf]
  %v203 = vld [vmem:[%s0 + $0x2bc] sm:$0xf]
  %v204 = vld [vmem:[%s0 + $0x2c0] sm:$0xf]
  %v205 = vld [vmem:[%s0 + $0x2c4] sm:$0xf]
  %v206 = vld [vmem:[%s0 + $0x2c8] sm:$0xf]
  %v207 = vld [vmem:[%s0 + $0x2cc] sm:$0xf]
  %v208 = vld [vmem:[%s0 + $0x2d0] sm:$0xf]
  %v209 = vld [vmem:[%s0 + $0x2d4] sm:$0xf]
  %v210 = vld [vmem:[%s0 + $0x2d8] sm:$0xf]
  %v211 = vld [vmem:[%s0 + $0x2dc] sm:$0xf]
  %v212 = vld [vmem:[%s0 + $0x2e0] sm:$0xf]
  %v213 = vld [vmem:[%s0 + $0x2e4] sm:$0xf]
  %v214 = vld [vmem:[%s0 + $0x2e8] sm:$0xf]
  %v215 = vld [vmem:[%s0 + $0x2ec] sm:$0xf]
  %v216 = vld [vmem:[%s0 + $0x2f0] sm:$0xf]
  %v217 = vld [vmem:[%s0 + $0x2f4] sm:$0xf]
  %v218 = vld [vmem:[%s0 + $0x2f8] sm:$0xf]
  %v219 = vld [vmem:[%s0 + $0x2fc] sm:$0xf]
  %v220 = vld [vmem:[%s0 + $0x300] sm:$0xf]
  %v221 = vld [vmem:[%s0 + $0x304] sm:$0xf]
  %v222 = vld [vmem:[%s0 + $0x308] sm:$0xf]
  %v223 = vld [vmem:[%s0 + $0x30c] sm:$0xf]
  %v224 = vld [vmem:[%s0 + $0x310] sm:$0xf]
  %v225 = vld [vmem:[%s0 + $0x314] sm:$0xf]
  %v226 = vld [vmem:[%s0 + $0x318] sm:$0xf]
  %v227 = vld [vmem:[%s0 + $0x31c] sm:$0xf]
  %v228 = vld [vmem:[%s0 + $0x320] sm:$0xf]
  %v229 = vld [vmem:[%s0 + $0x324] sm:$0xf]
  %v230 = vld [vmem:[%s0 + $0x328] sm:$0xf]
  %v231 = vld [vmem:[%s0 + $0x32c] sm:$0xf]
  %v232 = vld [vmem:[%s0 + $0x330] sm:$0xf]
  %v233 = vld [vmem:[%s0 + $0x334] sm:$0xf]
  %v234 = vld [vmem:[%s0 + $0x338] sm:$0xf]
  %v235 = vld [vmem:[%s0 + $0x33c] sm:$0xf]
  %v236 = vld [vmem:[%s0 + $0x340] sm:$0xf]
  %v237 = vld [vmem:[%s0 + $0x344] sm:$0xf]
  %v238 = vld [vmem:[%s0 + $0x348] sm:$0xf]
  %v239 = vld [vmem:[%s0 + $0x34c] sm:$0xf]
  %v240 = vld [vmem:[%s0 + $0x350] sm:$0xf]
  %v241 = vld [vmem:[%s0 + $0x354] sm:$0xf]
  %v242 = vld [vmem:[%s0 + $0x358] sm:$0xf]
  %v243 = vld [vmem:[%s0 + $0x35c] sm:$0xf]
  %v244 = vld [vmem:[%s0 + $0x360] sm:$0xf]
  %v245 = vld [vmem:[%s0 + $0x364] sm:$0xf]
  %v246 = vld [vmem:[%s0 + $0x368] sm:$0xf]
  %v247 = vld [vmem:[%s0 + $0x36c] sm:$0xf]
  %v248 = vld [vmem:[%s0 + $0x370] sm:$0xf]
  %v249 = vld [vmem:[%s0 + $0x374] sm:$0xf]
  %v250 = vld [vmem:[%s0 + $0x378] sm:$0xf]
  %v251 = vld [vmem:[%s0 + $0x37c] sm:$0xf]
  %v252 = vld [vmem:[%s0 + $0x380] sm:$0xf]
  %v253 = vld [vmem:[%s0 + $0x384] sm:$0xf]
  %v254 = vld [vmem:[%s0 + $0x388] sm:$0xf]
  %v255 = vld [vmem:[%s0 + $0x38c] sm:$0xf]
  %v256 = vld [vmem:[%s0 + $0x390] sm:$0xf]
  %v257 = vld [vmem:[%s0 + $0x394] sm:$0xf]
  %v258 = vld [vmem:[%s0 + $0x398] sm:$0xf]
  %v259 = vld [vmem:[%s0 + $0x39c] sm:$0xf]
  %v260 = vld [vmem:[%s0 + $0x3a0] sm:$0xf]
  %v261 = vld [vmem:[%s0 + $0x3a4] sm:$0xf]
  %v262 = vld [vmem:[%s0 + $0x3a8] sm:$0xf]
  %v263 = vld [vmem:[%s0 + $0x3ac] sm:$0xf]
  %v264 = vld [vmem:[%s0 + $0x3b0] sm:$0xf]
  %v265 = vld [vmem:[%s0 + $0x3b4] sm:$0xf]
  %v266 = vld [vmem:[%s0 + $0x3b8] sm:$0xf]
  %v267 = vld [vmem:[%s0 + $0x3bc] sm:$0xf]
  %v268 = vld [vmem:[%s0 + $0x3c0] sm:$0xf]
  %v269 = vld [vmem:[%s0 + $0x3c4] sm:$0xf]
  %v270 = vld [vmem:[%s0 + $0x3c8] sm:$0xf]
  %v271 = vld [vmem:[%s0 + $0x3cc] sm:$0xf]
  %v272 = vld [vmem:[%s0 + $0x3d0] sm:$0xf]
  %v273 = vld [vmem:[%s0 + $0x3d4] sm:$0xf]
  %v274 = vld [vmem:[%s0 + $0x3d8] sm:$0xf]
  %v275 = vld [vmem:[%s0 + $0x3dc] sm:$0xf]
  %v276 = vld [vmem:[%s0 + $0x3e0] sm:$0xf]
  %v277 = vld [vmem:[%s0 + $0x3e4] sm:$0xf]
  %v278 = vld [vmem:[%s0 + $0x3e8] sm:$0xf]
  %v279 = vld [vmem:[%s0 + $0x3ec] sm:$0xf]
  %v280 = vld [vmem:[%s0 + $0x3f0] sm:$0xf]
  %v281 = vld [vmem:[%s0 + $0x3f4] sm:$0xf]
  %v282 = vld [vmem:[%s0 + $0x3f8] sm:$0xf]
  %v283 = vld [vmem:[%s0 + $0x3fc] sm:$0xf]
  %v284 = vld [vmem:[%s1] sm:$0xf]
  %v285 = vld [vmem:[%s1 + $0x4] sm:$0xf]
  %v286 = vld [vmem:[%s1 + $0x8] sm:$0xf]
  %v287 = vld [vmem:[%s1 + $0xc] sm:$0xf]
  %v288 = vld [vmem:[%s1 + $0x10] sm:$0xf]
  %v289 = vld [vmem:[%s1 + $0x14] sm:$0xf]
  %v290 = vld [vmem:[%s1 + $0x18] sm:$0xf]
  %v291 = vld [vmem:[%s1 + $0x1c] sm:$0xf]
  %v292 = vld [vmem:[%s2] sm:$0xff]
  %v293 = vld [vmem:[%s2 + $0x8] sm:$0xff]
  %v294 = vld [vmem:[%s2 + $0x10] sm:$0xff]
  %v295 = vld [vmem:[%s2 + $0x18] sm:$0xff]
  %v296 = vld [vmem:[%s2 + $0x20] sm:$0xff]
  %v297 = vld [vmem:[%s2 + $0x28] sm:$0xff]
  %v298 = vld [vmem:[%s2 + $0x30] sm:$0xff]
  %v299 = vld [vmem:[%s2 + $0x38] sm:$0xff]
  %301 = vset.pattern.permute.xlu0 0
  %302 = vperm.xlu0 %301, %v292
  %v303 = vpop.permute.xlu0 %302
  %306 = vset.pattern.permute.xlu0 0
  %307 = vperm.xlu0 %306, %v293
  %v308 = vpop.permute.xlu0 %307
  %311 = vset.pattern.permute.xlu0 0
  %312 = vperm.xlu0 %311, %v294
  %v313 = vpop.permute.xlu0 %312
  %316 = vset.pattern.permute.xlu0 0
  %317 = vperm.xlu0 %316, %v295
  %v318 = vpop.permute.xlu0 %317
  %321 = vset.pattern.permute.xlu0 0
  %322 = vperm.xlu0 %321, %v296
  %v323 = vpop.permute.xlu0 %322
  %326 = vset.pattern.permute.xlu0 0
  %327 = vperm.xlu0 %326, %v297
  %v328 = vpop.permute.xlu0 %327
  %331 = vset.pattern.permute.xlu0 0
  %332 = vperm.xlu0 %331, %v298
  %v333 = vpop.permute.xlu0 %332
  %336 = vset.pattern.permute.xlu0 0
  %337 = vperm.xlu0 %336, %v299
  %v338 = vpop.permute.xlu0 %337
  %v348 = vunpack.c.l.b16 %v284
  %v349 = vunpack.c.l.b16 %v285
  %v350 = vunpack.c.l.b16 %v286
  %v351 = vunpack.c.l.b16 %v287
  %v352 = vunpack.c.l.b16 %v288
  %v353 = vunpack.c.l.b16 %v289
  %v354 = vunpack.c.l.b16 %v290
  %v355 = vunpack.c.l.b16 %v291
  %v356 = vpack.c.b16 %v349, %v348
  %v357 = vpack.c.b16 %v351, %v350
  %v358 = vpack.c.b16 %v353, %v352
  %v359 = vpack.c.b16 %v355, %v354
  %v616 = vunpack.c.l.b16 %v28
  %v617 = vunpack.c.l.b16 %v29
  %v618 = vunpack.c.l.b16 %v30
  %v619 = vunpack.c.l.b16 %v31
  %v620 = vunpack.c.l.b16 %v32
  %v621 = vunpack.c.l.b16 %v33
  %v622 = vunpack.c.l.b16 %v34
  %v623 = vunpack.c.l.b16 %v35
  %v624 = vunpack.c.l.b16 %v36
  %v625 = vunpack.c.l.b16 %v37
  %v626 = vunpack.c.l.b16 %v38
  %v627 = vunpack.c.l.b16 %v39
  %v628 = vunpack.c.l.b16 %v40
  %v629 = vunpack.c.l.b16 %v41
  %v630 = vunpack.c.l.b16 %v42
  %v631 = vunpack.c.l.b16 %v43
  %v632 = vunpack.c.l.b16 %v44
  %v633 = vunpack.c.l.b16 %v45
  %v634 = vunpack.c.l.b16 %v46
  %v635 = vunpack.c.l.b16 %v47
  %v636 = vunpack.c.l.b16 %v48
  %v637 = vunpack.c.l.b16 %v49
  %v638 = vunpack.c.l.b16 %v50
  %v639 = vunpack.c.l.b16 %v51
  %v640 = vunpack.c.l.b16 %v52
  %v641 = vunpack.c.l.b16 %v53
  %v642 = vunpack.c.l.b16 %v54
  %v643 = vunpack.c.l.b16 %v55
  %v644 = vunpack.c.l.b16 %v56
  %v645 = vunpack.c.l.b16 %v57
  %v646 = vunpack.c.l.b16 %v58
  %v647 = vunpack.c.l.b16 %v59
  %v648 = vunpack.c.l.b16 %v60
  %v649 = vunpack.c.l.b16 %v61
  %v650 = vunpack.c.l.b16 %v62
  %v651 = vunpack.c.l.b16 %v63
  %v652 = vunpack.c.l.b16 %v64
  %v653 = vunpack.c.l.b16 %v65
  %v654 = vunpack.c.l.b16 %v66
  %v655 = vunpack.c.l.b16 %v67
  %v656 = vunpack.c.l.b16 %v68
  %v657 = vunpack.c.l.b16 %v69
  %v658 = vunpack.c.l.b16 %v70
  %v659 = vunpack.c.l.b16 %v71
  %v660 = vunpack.c.l.b16 %v72
  %v661 = vunpack.c.l.b16 %v73
  %v662 = vunpack.c.l.b16 %v74
  %v663 = vunpack.c.l.b16 %v75
  %v664 = vunpack.c.l.b16 %v76
  %v665 = vunpack.c.l.b16 %v77
  %v666 = vunpack.c.l.b16 %v78
  %v667 = vunpack.c.l.b16 %v79
  %v668 = vunpack.c.l.b16 %v80
  %v669 = vunpack.c.l.b16 %v81
  %v670 = vunpack.c.l.b16 %v82
  %v671 = vunpack.c.l.b16 %v83
  %v672 = vunpack.c.l.b16 %v84
  %v673 = vunpack.c.l.b16 %v85
  %v674 = vunpack.c.l.b16 %v86
  %v675 = vunpack.c.l.b16 %v87
  %v676 = vunpack.c.l.b16 %v88
  %v677 = vunpack.c.l.b16 %v89
  %v678 = vunpack.c.l.b16 %v90
  %v679 = vunpack.c.l.b16 %v91
  %v680 = vunpack.c.l.b16 %v92
  %v681 = vunpack.c.l.b16 %v93
  %v682 = vunpack.c.l.b16 %v94
  %v683 = vunpack.c.l.b16 %v95
  %v684 = vunpack.c.l.b16 %v96
  %v685 = vunpack.c.l.b16 %v97
  %v686 = vunpack.c.l.b16 %v98
  %v687 = vunpack.c.l.b16 %v99
  %v688 = vunpack.c.l.b16 %v100
  %v689 = vunpack.c.l.b16 %v101
  %v690 = vunpack.c.l.b16 %v102
  %v691 = vunpack.c.l.b16 %v103
  %v692 = vunpack.c.l.b16 %v104
  %v693 = vunpack.c.l.b16 %v105
  %v694 = vunpack.c.l.b16 %v106
  %v695 = vunpack.c.l.b16 %v107
  %v696 = vunpack.c.l.b16 %v108
  %v697 = vunpack.c.l.b16 %v109
  %v698 = vunpack.c.l.b16 %v110
  %v699 = vunpack.c.l.b16 %v111
  %v700 = vunpack.c.l.b16 %v112
  %v701 = vunpack.c.l.b16 %v113
  %v702 = vunpack.c.l.b16 %v114
  %v703 = vunpack.c.l.b16 %v115
  %v704 = vunpack.c.l.b16 %v116
  %v705 = vunpack.c.l.b16 %v117
  %v706 = vunpack.c.l.b16 %v118
  %v707 = vunpack.c.l.b16 %v119
  %v708 = vunpack.c.l.b16 %v120
  %v709 = vunpack.c.l.b16 %v121
  %v710 = vunpack.c.l.b16 %v122
  %v711 = vunpack.c.l.b16 %v123
  %v712 = vunpack.c.l.b16 %v124
  %v713 = vunpack.c.l.b16 %v125
  %v714 = vunpack.c.l.b16 %v126
  %v715 = vunpack.c.l.b16 %v127
  %v716 = vunpack.c.l.b16 %v128
  %v717 = vunpack.c.l.b16 %v129
  %v718 = vunpack.c.l.b16 %v130
  %v719 = vunpack.c.l.b16 %v131
  %v720 = vunpack.c.l.b16 %v132
  %v721 = vunpack.c.l.b16 %v133
  %v722 = vunpack.c.l.b16 %v134
  %v723 = vunpack.c.l.b16 %v135
  %v724 = vunpack.c.l.b16 %v136
  %v725 = vunpack.c.l.b16 %v137
  %v726 = vunpack.c.l.b16 %v138
  %v727 = vunpack.c.l.b16 %v139
  %v728 = vunpack.c.l.b16 %v140
  %v729 = vunpack.c.l.b16 %v141
  %v730 = vunpack.c.l.b16 %v142
  %v731 = vunpack.c.l.b16 %v143
  %v732 = vunpack.c.l.b16 %v144
  %v733 = vunpack.c.l.b16 %v145
  %v734 = vunpack.c.l.b16 %v146
  %v735 = vunpack.c.l.b16 %v147
  %v736 = vunpack.c.l.b16 %v148
  %v737 = vunpack.c.l.b16 %v149
  %v738 = vunpack.c.l.b16 %v150
  %v739 = vunpack.c.l.b16 %v151
  %v740 = vunpack.c.l.b16 %v152
  %v741 = vunpack.c.l.b16 %v153
  %v742 = vunpack.c.l.b16 %v154
  %v743 = vunpack.c.l.b16 %v155
  %v744 = vunpack.c.l.b16 %v156
  %v745 = vunpack.c.l.b16 %v157
  %v746 = vunpack.c.l.b16 %v158
  %v747 = vunpack.c.l.b16 %v159
  %v748 = vunpack.c.l.b16 %v160
  %v749 = vunpack.c.l.b16 %v161
  %v750 = vunpack.c.l.b16 %v162
  %v751 = vunpack.c.l.b16 %v163
  %v752 = vunpack.c.l.b16 %v164
  %v753 = vunpack.c.l.b16 %v165
  %v754 = vunpack.c.l.b16 %v166
  %v755 = vunpack.c.l.b16 %v167
  %v756 = vunpack.c.l.b16 %v168
  %v757 = vunpack.c.l.b16 %v169
  %v758 = vunpack.c.l.b16 %v170
  %v759 = vunpack.c.l.b16 %v171
  %v760 = vunpack.c.l.b16 %v172
  %v761 = vunpack.c.l.b16 %v173
  %v762 = vunpack.c.l.b16 %v174
  %v763 = vunpack.c.l.b16 %v175
  %v764 = vunpack.c.l.b16 %v176
  %v765 = vunpack.c.l.b16 %v177
  %v766 = vunpack.c.l.b16 %v178
  %v767 = vunpack.c.l.b16 %v179
  %v768 = vunpack.c.l.b16 %v180
  %v769 = vunpack.c.l.b16 %v181
  %v770 = vunpack.c.l.b16 %v182
  %v771 = vunpack.c.l.b16 %v183
  %v772 = vunpack.c.l.b16 %v184
  %v773 = vunpack.c.l.b16 %v185
  %v774 = vunpack.c.l.b16 %v186
  %v775 = vunpack.c.l.b16 %v187
  %v776 = vunpack.c.l.b16 %v188
  %v777 = vunpack.c.l.b16 %v189
  %v778 = vunpack.c.l.b16 %v190
  %v779 = vunpack.c.l.b16 %v191
  %v780 = vunpack.c.l.b16 %v192
  %v781 = vunpack.c.l.b16 %v193
  %v782 = vunpack.c.l.b16 %v194
  %v783 = vunpack.c.l.b16 %v195
  %v784 = vunpack.c.l.b16 %v196
  %v785 = vunpack.c.l.b16 %v197
  %v786 = vunpack.c.l.b16 %v198
  %v787 = vunpack.c.l.b16 %v199
  %v788 = vunpack.c.l.b16 %v200
  %v789 = vunpack.c.l.b16 %v201
  %v790 = vunpack.c.l.b16 %v202
  %v791 = vunpack.c.l.b16 %v203
  %v792 = vunpack.c.l.b16 %v204
  %v793 = vunpack.c.l.b16 %v205
  %v794 = vunpack.c.l.b16 %v206
  %v795 = vunpack.c.l.b16 %v207
  %v796 = vunpack.c.l.b16 %v208
  %v797 = vunpack.c.l.b16 %v209
  %v798 = vunpack.c.l.b16 %v210
  %v799 = vunpack.c.l.b16 %v211
  %v800 = vunpack.c.l.b16 %v212
  %v801 = vunpack.c.l.b16 %v213
  %v802 = vunpack.c.l.b16 %v214
  %v803 = vunpack.c.l.b16 %v215
  %v804 = vunpack.c.l.b16 %v216
  %v805 = vunpack.c.l.b16 %v217
  %v806 = vunpack.c.l.b16 %v218
  %v807 = vunpack.c.l.b16 %v219
  %v808 = vunpack.c.l.b16 %v220
  %v809 = vunpack.c.l.b16 %v221
  %v810 = vunpack.c.l.b16 %v222
  %v811 = vunpack.c.l.b16 %v223
  %v812 = vunpack.c.l.b16 %v224
  %v813 = vunpack.c.l.b16 %v225
  %v814 = vunpack.c.l.b16 %v226
  %v815 = vunpack.c.l.b16 %v227
  %v816 = vunpack.c.l.b16 %v228
  %v817 = vunpack.c.l.b16 %v229
  %v818 = vunpack.c.l.b16 %v230
  %v819 = vunpack.c.l.b16 %v231
  %v820 = vunpack.c.l.b16 %v232
  %v821 = vunpack.c.l.b16 %v233
  %v822 = vunpack.c.l.b16 %v234
  %v823 = vunpack.c.l.b16 %v235
  %v824 = vunpack.c.l.b16 %v236
  %v825 = vunpack.c.l.b16 %v237
  %v826 = vunpack.c.l.b16 %v238
  %v827 = vunpack.c.l.b16 %v239
  %v828 = vunpack.c.l.b16 %v240
  %v829 = vunpack.c.l.b16 %v241
  %v830 = vunpack.c.l.b16 %v242
  %v831 = vunpack.c.l.b16 %v243
  %v832 = vunpack.c.l.b16 %v244
  %v833 = vunpack.c.l.b16 %v245
  %v834 = vunpack.c.l.b16 %v246
  %v835 = vunpack.c.l.b16 %v247
  %v836 = vunpack.c.l.b16 %v248
  %v837 = vunpack.c.l.b16 %v249
  %v838 = vunpack.c.l.b16 %v250
  %v839 = vunpack.c.l.b16 %v251
  %v840 = vunpack.c.l.b16 %v252
  %v841 = vunpack.c.l.b16 %v253
  %v842 = vunpack.c.l.b16 %v254
  %v843 = vunpack.c.l.b16 %v255
  %v844 = vunpack.c.l.b16 %v256
  %v845 = vunpack.c.l.b16 %v257
  %v846 = vunpack.c.l.b16 %v258
  %v847 = vunpack.c.l.b16 %v259
  %v848 = vunpack.c.l.b16 %v260
  %v849 = vunpack.c.l.b16 %v261
  %v850 = vunpack.c.l.b16 %v262
  %v851 = vunpack.c.l.b16 %v263
  %v852 = vunpack.c.l.b16 %v264
  %v853 = vunpack.c.l.b16 %v265
  %v854 = vunpack.c.l.b16 %v266
  %v855 = vunpack.c.l.b16 %v267
  %v856 = vunpack.c.l.b16 %v268
  %v857 = vunpack.c.l.b16 %v269
  %v858 = vunpack.c.l.b16 %v270
  %v859 = vunpack.c.l.b16 %v271
  %v860 = vunpack.c.l.b16 %v272
  %v861 = vunpack.c.l.b16 %v273
  %v862 = vunpack.c.l.b16 %v274
  %v863 = vunpack.c.l.b16 %v275
  %v864 = vunpack.c.l.b16 %v276
  %v865 = vunpack.c.l.b16 %v277
  %v866 = vunpack.c.l.b16 %v278
  %v867 = vunpack.c.l.b16 %v279
  %v868 = vunpack.c.l.b16 %v280
  %v869 = vunpack.c.l.b16 %v281
  %v870 = vunpack.c.l.b16 %v282
  %v871 = vunpack.c.l.b16 %v283
  %v872 = vpack.c.b16 %v617, %v616
  %v873 = vpack.c.b16 %v619, %v618
  %v874 = vpack.c.b16 %v621, %v620
  %v875 = vpack.c.b16 %v623, %v622
  %v876 = vpack.c.b16 %v625, %v624
  %v877 = vpack.c.b16 %v627, %v626
  %v878 = vpack.c.b16 %v629, %v628
  %v879 = vpack.c.b16 %v631, %v630
  %v880 = vpack.c.b16 %v633, %v632
  %v881 = vpack.c.b16 %v635, %v634
  %v882 = vpack.c.b16 %v637, %v636
  %v883 = vpack.c.b16 %v639, %v638
  %v884 = vpack.c.b16 %v641, %v640
  %v885 = vpack.c.b16 %v643, %v642
  %v886 = vpack.c.b16 %v645, %v644
  %v887 = vpack.c.b16 %v647, %v646
  %v888 = vpack.c.b16 %v649, %v648
  %v889 = vpack.c.b16 %v651, %v650
  %v890 = vpack.c.b16 %v653, %v652
  %v891 = vpack.c.b16 %v655, %v654
  %v892 = vpack.c.b16 %v657, %v656
  %v893 = vpack.c.b16 %v659, %v658
  %v894 = vpack.c.b16 %v661, %v660
  %v895 = vpack.c.b16 %v663, %v662
  %v896 = vpack.c.b16 %v665, %v664
  %v897 = vpack.c.b16 %v667, %v666
  %v898 = vpack.c.b16 %v669, %v668
  %v899 = vpack.c.b16 %v671, %v670
  %v900 = vpack.c.b16 %v673, %v672
  %v901 = vpack.c.b16 %v675, %v674
  %v902 = vpack.c.b16 %v677, %v676
  %v903 = vpack.c.b16 %v679, %v678
  %v904 = vpack.c.b16 %v681, %v680
  %v905 = vpack.c.b16 %v683, %v682
  %v906 = vpack.c.b16 %v685, %v684
  %v907 = vpack.c.b16 %v687, %v686
  %v908 = vpack.c.b16 %v689, %v688
  %v909 = vpack.c.b16 %v691, %v690
  %v910 = vpack.c.b16 %v693, %v692
  %v911 = vpack.c.b16 %v695, %v694
  %v912 = vpack.c.b16 %v697, %v696
  %v913 = vpack.c.b16 %v699, %v698
  %v914 = vpack.c.b16 %v701, %v700
  %v915 = vpack.c.b16 %v703, %v702
  %v916 = vpack.c.b16 %v705, %v704
  %v917 = vpack.c.b16 %v707, %v706
  %v918 = vpack.c.b16 %v709, %v708
  %v919 = vpack.c.b16 %v711, %v710
  %v920 = vpack.c.b16 %v713, %v712
  %v921 = vpack.c.b16 %v715, %v714
  %v922 = vpack.c.b16 %v717, %v716
  %v923 = vpack.c.b16 %v719, %v718
  %v924 = vpack.c.b16 %v721, %v720
  %v925 = vpack.c.b16 %v723, %v722
  %v926 = vpack.c.b16 %v725, %v724
  %v927 = vpack.c.b16 %v727, %v726
  %v928 = vpack.c.b16 %v729, %v728
  %v929 = vpack.c.b16 %v731, %v730
  %v930 = vpack.c.b16 %v733, %v732
  %v931 = vpack.c.b16 %v735, %v734
  %v932 = vpack.c.b16 %v737, %v736
  %v933 = vpack.c.b16 %v739, %v738
  %v934 = vpack.c.b16 %v741, %v740
  %v935 = vpack.c.b16 %v743, %v742
  %v936 = vpack.c.b16 %v745, %v744
  %v937 = vpack.c.b16 %v747, %v746
  %v938 = vpack.c.b16 %v749, %v748
  %v939 = vpack.c.b16 %v751, %v750
  %v940 = vpack.c.b16 %v753, %v752
  %v941 = vpack.c.b16 %v755, %v754
  %v942 = vpack.c.b16 %v757, %v756
  %v943 = vpack.c.b16 %v759, %v758
  %v944 = vpack.c.b16 %v761, %v760
  %v945 = vpack.c.b16 %v763, %v762
  %v946 = vpack.c.b16 %v765, %v764
  %v947 = vpack.c.b16 %v767, %v766
  %v948 = vpack.c.b16 %v769, %v768
  %v949 = vpack.c.b16 %v771, %v770
  %v950 = vpack.c.b16 %v773, %v772
  %v951 = vpack.c.b16 %v775, %v774
  %v952 = vpack.c.b16 %v777, %v776
  %v953 = vpack.c.b16 %v779, %v778
  %v954 = vpack.c.b16 %v781, %v780
  %v955 = vpack.c.b16 %v783, %v782
  %v956 = vpack.c.b16 %v785, %v784
  %v957 = vpack.c.b16 %v787, %v786
  %v958 = vpack.c.b16 %v789, %v788
  %v959 = vpack.c.b16 %v791, %v790
  %v960 = vpack.c.b16 %v793, %v792
  %v961 = vpack.c.b16 %v795, %v794
  %v962 = vpack.c.b16 %v797, %v796
  %v963 = vpack.c.b16 %v799, %v798
  %v964 = vpack.c.b16 %v801, %v800
  %v965 = vpack.c.b16 %v803, %v802
  %v966 = vpack.c.b16 %v805, %v804
  %v967 = vpack.c.b16 %v807, %v806
  %v968 = vpack.c.b16 %v809, %v808
  %v969 = vpack.c.b16 %v811, %v810
  %v970 = vpack.c.b16 %v813, %v812
  %v971 = vpack.c.b16 %v815, %v814
  %v972 = vpack.c.b16 %v817, %v816
  %v973 = vpack.c.b16 %v819, %v818
  %v974 = vpack.c.b16 %v821, %v820
  %v975 = vpack.c.b16 %v823, %v822
  %v976 = vpack.c.b16 %v825, %v824
  %v977 = vpack.c.b16 %v827, %v826
  %v978 = vpack.c.b16 %v829, %v828
  %v979 = vpack.c.b16 %v831, %v830
  %v980 = vpack.c.b16 %v833, %v832
  %v981 = vpack.c.b16 %v835, %v834
  %v982 = vpack.c.b16 %v837, %v836
  %v983 = vpack.c.b16 %v839, %v838
  %v984 = vpack.c.b16 %v841, %v840
  %v985 = vpack.c.b16 %v843, %v842
  %v986 = vpack.c.b16 %v845, %v844
  %v987 = vpack.c.b16 %v847, %v846
  %v988 = vpack.c.b16 %v849, %v848
  %v989 = vpack.c.b16 %v851, %v850
  %v990 = vpack.c.b16 %v853, %v852
  %v991 = vpack.c.b16 %v855, %v854
  %v992 = vpack.c.b16 %v857, %v856
  %v993 = vpack.c.b16 %v859, %v858
  %v994 = vpack.c.b16 %v861, %v860
  %v995 = vpack.c.b16 %v863, %v862
  %v996 = vpack.c.b16 %v865, %v864
  %v997 = vpack.c.b16 %v867, %v866
  %v998 = vpack.c.b16 %v869, %v868
  %v999 = vpack.c.b16 %v871, %v870
  %vm1000 = vcmask 261120
  %v1002 = vsel %vm1000, %v356, 0
  %v1005 = vsel %vm1000, %v357, 0
  %v1008 = vsel %vm1000, %v358, 0
  %v1011 = vsel %vm1000, %v359, 0
  %v1014 = vsel %vm1000, %v872, 0
  %v1017 = vsel %vm1000, %v873, 0
  %v1020 = vsel %vm1000, %v874, 0
  %v1023 = vsel %vm1000, %v875, 0
  %v1026 = vsel %vm1000, %v876, 0
  %v1029 = vsel %vm1000, %v877, 0
  %v1032 = vsel %vm1000, %v878, 0
  %v1035 = vsel %vm1000, %v879, 0
  %v1038 = vsel %vm1000, %v880, 0
  %v1041 = vsel %vm1000, %v881, 0
  %v1044 = vsel %vm1000, %v882, 0
  %v1047 = vsel %vm1000, %v883, 0
  %v1050 = vsel %vm1000, %v884, 0
  %v1053 = vsel %vm1000, %v885, 0
  %v1056 = vsel %vm1000, %v886, 0
  %v1059 = vsel %vm1000, %v887, 0
  %v1062 = vsel %vm1000, %v888, 0
  %v1065 = vsel %vm1000, %v889, 0
  %v1068 = vsel %vm1000, %v890, 0
  %v1071 = vsel %vm1000, %v891, 0
  %v1074 = vsel %vm1000, %v892, 0
  %v1077 = vsel %vm1000, %v893, 0
  %v1080 = vsel %vm1000, %v894, 0
  %v1083 = vsel %vm1000, %v895, 0
  %v1086 = vsel %vm1000, %v896, 0
  %v1089 = vsel %vm1000, %v897, 0
  %v1092 = vsel %vm1000, %v898, 0
  %v1095 = vsel %vm1000, %v899, 0
  %v1098 = vsel %vm1000, %v900, 0
  %v1101 = vsel %vm1000, %v901, 0
  %v1104 = vsel %vm1000, %v902, 0
  %v1107 = vsel %vm1000, %v903, 0
  %v1110 = vsel %vm1000, %v904, 0
  %v1113 = vsel %vm1000, %v905, 0
  %v1116 = vsel %vm1000, %v906, 0
  %v1119 = vsel %vm1000, %v907, 0
  %v1122 = vsel %vm1000, %v908, 0
  %v1125 = vsel %vm1000, %v909, 0
  %v1128 = vsel %vm1000, %v910, 0
  %v1131 = vsel %vm1000, %v911, 0
  %v1134 = vsel %vm1000, %v912, 0
  %v1137 = vsel %vm1000, %v913, 0
  %v1140 = vsel %vm1000, %v914, 0
  %v1143 = vsel %vm1000, %v915, 0
  %v1146 = vsel %vm1000, %v916, 0
  %v1149 = vsel %vm1000, %v917, 0
  %v1152 = vsel %vm1000, %v918, 0
  %v1155 = vsel %vm1000, %v919, 0
  %v1158 = vsel %vm1000, %v920, 0
  %v1161 = vsel %vm1000, %v921, 0
  %v1164 = vsel %vm1000, %v922, 0
  %v1167 = vsel %vm1000, %v923, 0
  %v1170 = vsel %vm1000, %v924, 0
  %v1173 = vsel %vm1000, %v925, 0
  %v1176 = vsel %vm1000, %v926, 0
  %v1179 = vsel %vm1000, %v927, 0
  %v1182 = vsel %vm1000, %v928, 0
  %v1185 = vsel %vm1000, %v929, 0
  %v1188 = vsel %vm1000, %v930, 0
  %v1191 = vsel %vm1000, %v931, 0
  %v1194 = vsel %vm1000, %v932, 0
  %v1197 = vsel %vm1000, %v933, 0
  %v1200 = vsel %vm1000, %v934, 0
  %v1203 = vsel %vm1000, %v935, 0
  %v1206 = vsel %vm1000, %v936, 0
  %v1209 = vsel %vm1000, %v937, 0
  %v1212 = vsel %vm1000, %v938, 0
  %v1215 = vsel %vm1000, %v939, 0
  %v1218 = vsel %vm1000, %v940, 0
  %v1221 = vsel %vm1000, %v941, 0
  %v1224 = vsel %vm1000, %v942, 0
  %v1227 = vsel %vm1000, %v943, 0
  %v1230 = vsel %vm1000, %v944, 0
  %v1233 = vsel %vm1000, %v945, 0
  %v1236 = vsel %vm1000, %v946, 0
  %v1239 = vsel %vm1000, %v947, 0
  %v1242 = vsel %vm1000, %v948, 0
  %v1245 = vsel %vm1000, %v949, 0
  %v1248 = vsel %vm1000, %v950, 0
  %v1251 = vsel %vm1000, %v951, 0
  %v1254 = vsel %vm1000, %v952, 0
  %v1257 = vsel %vm1000, %v953, 0
  %v1260 = vsel %vm1000, %v954, 0
  %v1263 = vsel %vm1000, %v955, 0
  %v1266 = vsel %vm1000, %v956, 0
  %v1269 = vsel %vm1000, %v957, 0
  %v1272 = vsel %vm1000, %v958, 0
  %v1275 = vsel %vm1000, %v959, 0
  %v1278 = vsel %vm1000, %v960, 0
  %v1281 = vsel %vm1000, %v961, 0
  %v1284 = vsel %vm1000, %v962, 0
  %v1287 = vsel %vm1000, %v963, 0
  %v1290 = vsel %vm1000, %v964, 0
  %v1293 = vsel %vm1000, %v965, 0
  %v1296 = vsel %vm1000, %v966, 0
  %v1299 = vsel %vm1000, %v967, 0
  %v1302 = vsel %vm1000, %v968, 0
  %v1305 = vsel %vm1000, %v969, 0
  %v1308 = vsel %vm1000, %v970, 0
  %v1311 = vsel %vm1000, %v971, 0
  %v1314 = vsel %vm1000, %v972, 0
  %v1317 = vsel %vm1000, %v973, 0
  %v1320 = vsel %vm1000, %v974, 0
  %v1323 = vsel %vm1000, %v975, 0
  %v1326 = vsel %vm1000, %v976, 0
  %v1329 = vsel %vm1000, %v977, 0
  %v1332 = vsel %vm1000, %v978, 0
  %v1335 = vsel %vm1000, %v979, 0
  %v1338 = vsel %vm1000, %v980, 0
  %v1341 = vsel %vm1000, %v981, 0
  %v1344 = vsel %vm1000, %v982, 0
  %v1347 = vsel %vm1000, %v983, 0
  %v1350 = vsel %vm1000, %v984, 0
  %v1353 = vsel %vm1000, %v985, 0
  %v1356 = vsel %vm1000, %v986, 0
  %v1359 = vsel %vm1000, %v987, 0
  %v1362 = vsel %vm1000, %v988, 0
  %v1365 = vsel %vm1000, %v989, 0
  %v1368 = vsel %vm1000, %v990, 0
  %v1371 = vsel %vm1000, %v991, 0
  %v1374 = vsel %vm1000, %v992, 0
  %v1377 = vsel %vm1000, %v993, 0
  %v1380 = vsel %vm1000, %v994, 0
  %v1383 = vsel %vm1000, %v995, 0
  %v1386 = vsel %vm1000, %v996, 0
  %v1389 = vsel %vm1000, %v997, 0
  %v1392 = vsel %vm1000, %v998, 0
  %v1395 = vsel %vm1000, %v999, 0
  %1397 = vmatprep.subr.bf16.mxu0 0
  %1398 = vmatpush1.bf16.xpose.msra.mxu0 %v1035
  %1399 = vmatprep.subr.bf16.mxu0 0
  %1400 = vmatpush1.bf16.xpose.msra.mxu0 %v1032
  %1401 = vmatprep.subr.bf16.mxu0 0
  %1402 = vmatpush1.bf16.xpose.msra.mxu0 %v1029
  %1403 = vmatprep.subr.bf16.mxu0 0
  %1404 = vmatpush1.bf16.xpose.msra.mxu0 %v1026
  %1405 = vmatprep.subr.bf16.mxu0 0
  %1406 = vmatpush1.bf16.xpose.msra.mxu0 %v1023
  %1407 = vmatprep.subr.bf16.mxu0 0
  %1408 = vmatpush1.bf16.xpose.msra.mxu0 %v1020
  %1409 = vmatprep.subr.bf16.mxu0 0
  %1410 = vmatpush1.bf16.xpose.msra.mxu0 %v1017
  %1411 = vmatprep.subr.bf16.mxu0 0
  %1412 = vmatpush1.bf16.xpose.msra.mxu0 %v1014
  %1413 = vmatprep.subr.bf16.mxu0 0
  %1414 = vmatpush2.bf16.xpose.msra.mxu0 %v1059
  %1415 = vmatprep.subr.bf16.mxu0 0
  %1416 = vmatpush2.bf16.xpose.msra.mxu0 %v1056
  %1417 = vmatprep.subr.bf16.mxu0 0
  %1418 = vmatpush2.bf16.xpose.msra.mxu0 %v1053
  %1419 = vmatprep.subr.bf16.mxu0 0
  %1420 = vmatpush2.bf16.xpose.msra.mxu0 %v1050
  %1421 = vmatprep.subr.bf16.mxu0 0
  %1422 = vmatpush2.bf16.xpose.msra.mxu0 %v1047
  %1423 = vmatprep.subr.bf16.mxu0 0
  %1424 = vmatpush2.bf16.xpose.msra.mxu0 %v1044
  %1425 = vmatprep.subr.bf16.mxu0 0
  %1426 = vmatpush2.bf16.xpose.msra.mxu0 %v1041
  %1427 = vmatprep.subr.bf16.mxu0 0
  %1428 = vmatpush2.bf16.xpose.msra.mxu0 %v1038
  %1429 = vmatprep.mubr.bf16.mxu0 0
  %1430 = vmatmul.mubr.bf16.gmra.mxu0 %v1002
  %v1431 = vpop.f32.mrf.mxu0
  %v1432 = vadd.f32 %v303, %v1431
  %v1433 = vpop.f32.mrf.mxu0
  %v1434 = vadd.f32 %v303, %v1433
  %v1435 = vpop.f32.mrf.mxu0
  %v1436 = vadd.f32 %v308, %v1435
  %v1437 = vpop.f32.mrf.mxu0
  %v1438 = vadd.f32 %v308, %v1437
  %1439 = vmatprep.mubr.bf16.mxu0 0
  %1440 = vmatmul.mubr.bf16.gmra.mxu0 %v1005
  %v1441 = vpop.f32.mrf.mxu0
  %v1442 = vadd.f32 %v313, %v1441
  %v1443 = vpop.f32.mrf.mxu0
  %v1444 = vadd.f32 %v313, %v1443
  %v1445 = vpop.f32.mrf.mxu0
  %v1446 = vadd.f32 %v318, %v1445
  %v1447 = vpop.f32.mrf.mxu0
  %v1448 = vadd.f32 %v318, %v1447
  %1449 = vmatprep.mubr.bf16.mxu0 0
  %1450 = vmatmul.mubr.bf16.gmra.mxu0 %v1008
  %v1451 = vpop.f32.mrf.mxu0
  %v1452 = vadd.f32 %v323, %v1451
  %v1453 = vpop.f32.mrf.mxu0
  %v1454 = vadd.f32 %v323, %v1453
  %v1455 = vpop.f32.mrf.mxu0
  %v1456 = vadd.f32 %v328, %v1455
  %v1457 = vpop.f32.mrf.mxu0
  %v1458 = vadd.f32 %v328, %v1457
  %1459 = vmatprep.mubr.bf16.mxu0 0
  %1460 = vmatmul.mubr.bf16.gmra.mxu0 %v1011
  %v1461 = vpop.f32.mrf.mxu0
  %v1462 = vadd.f32 %v333, %v1461
  %v1463 = vpop.f32.mrf.mxu0
  %v1464 = vadd.f32 %v333, %v1463
  %v1465 = vpop.f32.mrf.mxu0
  %v1466 = vadd.f32 %v338, %v1465
  %v1467 = vpop.f32.mrf.mxu0
  %v1468 = vadd.f32 %v338, %v1467
  %1469 = vdwg.mxu0
  %1470 = vmatprep.subr.bf16.mxu0 0
  %1471 = vmatpush1.bf16.xpose.msra.mxu0 %v1083
  %1472 = vmatprep.subr.bf16.mxu0 0
  %1473 = vmatpush1.bf16.xpose.msra.mxu0 %v1080
  %1474 = vmatprep.subr.bf16.mxu0 0
  %1475 = vmatpush1.bf16.xpose.msra.mxu0 %v1077
  %1476 = vmatprep.subr.bf16.mxu0 0
  %1477 = vmatpush1.bf16.xpose.msra.mxu0 %v1074
  %1478 = vmatprep.subr.bf16.mxu0 0
  %1479 = vmatpush1.bf16.xpose.msra.mxu0 %v1071
  %1480 = vmatprep.subr.bf16.mxu0 0
  %1481 = vmatpush1.bf16.xpose.msra.mxu0 %v1068
  %1482 = vmatprep.subr.bf16.mxu0 0
  %1483 = vmatpush1.bf16.xpose.msra.mxu0 %v1065
  %1484 = vmatprep.subr.bf16.mxu0 0
  %1485 = vmatpush1.bf16.xpose.msra.mxu0 %v1062
  %1486 = vmatprep.subr.bf16.mxu0 0
  %1487 = vmatpush2.bf16.xpose.msra.mxu0 %v1107
  %1488 = vmatprep.subr.bf16.mxu0 0
  %1489 = vmatpush2.bf16.xpose.msra.mxu0 %v1104
  %1490 = vmatprep.subr.bf16.mxu0 0
  %1491 = vmatpush2.bf16.xpose.msra.mxu0 %v1101
  %1492 = vmatprep.subr.bf16.mxu0 0
  %1493 = vmatpush2.bf16.xpose.msra.mxu0 %v1098
  %1494 = vmatprep.subr.bf16.mxu0 0
  %1495 = vmatpush2.bf16.xpose.msra.mxu0 %v1095
  %1496 = vmatprep.subr.bf16.mxu0 0
  %1497 = vmatpush2.bf16.xpose.msra.mxu0 %v1092
  %1498 = vmatprep.subr.bf16.mxu0 0
  %1499 = vmatpush2.bf16.xpose.msra.mxu0 %v1089
  %1500 = vmatprep.subr.bf16.mxu0 0
  %1501 = vmatpush2.bf16.xpose.msra.mxu0 %v1086
  %1502 = vmatprep.mubr.bf16.mxu0 0
  %1503 = vmatmul.mubr.bf16.gmra.mxu0 %v1002
  %v1504 = vpop.f32.mrf.mxu0
  %v1505 = vadd.f32 %v303, %v1504
  %v1506 = vpop.f32.mrf.mxu0
  %v1507 = vadd.f32 %v303, %v1506
  %v1508 = vpop.f32.mrf.mxu0
  %v1509 = vadd.f32 %v308, %v1508
  %v1510 = vpop.f32.mrf.mxu0
  %v1511 = vadd.f32 %v308, %v1510
  %1512 = vmatprep.mubr.bf16.mxu0 0
  %1513 = vmatmul.mubr.bf16.gmra.mxu0 %v1005
  %v1514 = vpop.f32.mrf.mxu0
  %v1515 = vadd.f32 %v313, %v1514
  %v1516 = vpop.f32.mrf.mxu0
  %v1517 = vadd.f32 %v313, %v1516
  %v1518 = vpop.f32.mrf.mxu0
  %v1519 = vadd.f32 %v318, %v1518
  %v1520 = vpop.f32.mrf.mxu0
  %v1521 = vadd.f32 %v318, %v1520
  %1522 = vmatprep.mubr.bf16.mxu0 0
  %1523 = vmatmul.mubr.bf16.gmra.mxu0 %v1008
  %v1524 = vpop.f32.mrf.mxu0
  %v1525 = vadd.f32 %v323, %v1524
  %v1526 = vpop.f32.mrf.mxu0
  %v1527 = vadd.f32 %v323, %v1526
  %v1528 = vpop.f32.mrf.mxu0
  %v1529 = vadd.f32 %v328, %v1528
  %v1530 = vpop.f32.mrf.mxu0
  %v1531 = vadd.f32 %v328, %v1530
  %1532 = vmatprep.mubr.bf16.mxu0 0
  %1533 = vmatmul.mubr.bf16.gmra.mxu0 %v1011
  %v1534 = vpop.f32.mrf.mxu0
  %v1535 = vadd.f32 %v333, %v1534
  %v1536 = vpop.f32.mrf.mxu0
  %v1537 = vadd.f32 %v333, %v1536
  %v1538 = vpop.f32.mrf.mxu0
  %v1539 = vadd.f32 %v338, %v1538
  %v1540 = vpop.f32.mrf.mxu0
  %v1541 = vadd.f32 %v338, %v1540
  %1542 = vdwg.mxu0
  %1543 = vmatprep.subr.bf16.mxu0 0
  %1544 = vmatpush1.bf16.xpose.msra.mxu0 %v1131
  %1545 = vmatprep.subr.bf16.mxu0 0
  %1546 = vmatpush1.bf16.xpose.msra.mxu0 %v1128
  %1547 = vmatprep.subr.bf16.mxu0 0
  %1548 = vmatpush1.bf16.xpose.msra.mxu0 %v1125
  %1549 = vmatprep.subr.bf16.mxu0 0
  %1550 = vmatpush1.bf16.xpose.msra.mxu0 %v1122
  %1551 = vmatprep.subr.bf16.mxu0 0
  %1552 = vmatpush1.bf16.xpose.msra.mxu0 %v1119
  %1553 = vmatprep.subr.bf16.mxu0 0
  %1554 = vmatpush1.bf16.xpose.msra.mxu0 %v1116
  %1555 = vmatprep.subr.bf16.mxu0 0
  %1556 = vmatpush1.bf16.xpose.msra.mxu0 %v1113
  %1557 = vmatprep.subr.bf16.mxu0 0
  %1558 = vmatpush1.bf16.xpose.msra.mxu0 %v1110
  %1559 = vmatprep.subr.bf16.mxu0 0
  %1560 = vmatpush2.bf16.xpose.msra.mxu0 %v1155
  %1561 = vmatprep.subr.bf16.mxu0 0
  %1562 = vmatpush2.bf16.xpose.msra.mxu0 %v1152
  %1563 = vmatprep.subr.bf16.mxu0 0
  %1564 = vmatpush2.bf16.xpose.msra.mxu0 %v1149
  %1565 = vmatprep.subr.bf16.mxu0 0
  %1566 = vmatpush2.bf16.xpose.msra.mxu0 %v1146
  %1567 = vmatprep.subr.bf16.mxu0 0
  %1568 = vmatpush2.bf16.xpose.msra.mxu0 %v1143
  %1569 = vmatprep.subr.bf16.mxu0 0
  %1570 = vmatpush2.bf16.xpose.msra.mxu0 %v1140
  %1571 = vmatprep.subr.bf16.mxu0 0
  %1572 = vmatpush2.bf16.xpose.msra.mxu0 %v1137
  %1573 = vmatprep.subr.bf16.mxu0 0
  %1574 = vmatpush2.bf16.xpose.msra.mxu0 %v1134
  %1575 = vmatprep.mubr.bf16.mxu0 0
  %1576 = vmatmul.mubr.bf16.gmra.mxu0 %v1002
  %v1577 = vpop.f32.mrf.mxu0
  %v1578 = vadd.f32 %v303, %v1577
  %v1579 = vpop.f32.mrf.mxu0
  %v1580 = vadd.f32 %v303, %v1579
  %v1581 = vpop.f32.mrf.mxu0
  %v1582 = vadd.f32 %v308, %v1581
  %v1583 = vpop.f32.mrf.mxu0
  %v1584 = vadd.f32 %v308, %v1583
  %1585 = vmatprep.mubr.bf16.mxu0 0
  %1586 = vmatmul.mubr.bf16.gmra.mxu0 %v1005
  %v1587 = vpop.f32.mrf.mxu0
  %v1588 = vadd.f32 %v313, %v1587
  %v1589 = vpop.f32.mrf.mxu0
  %v1590 = vadd.f32 %v313, %v1589
  %v1591 = vpop.f32.mrf.mxu0
  %v1592 = vadd.f32 %v318, %v1591
  %v1593 = vpop.f32.mrf.mxu0
  %v1594 = vadd.f32 %v318, %v1593
  %1595 = vmatprep.mubr.bf16.mxu0 0
  %1596 = vmatmul.mubr.bf16.gmra.mxu0 %v1008
  %v1597 = vpop.f32.mrf.mxu0
  %v1598 = vadd.f32 %v323, %v1597
  %v1599 = vpop.f32.mrf.mxu0
  %v1600 = vadd.f32 %v323, %v1599
  %v1601 = vpop.f32.mrf.mxu0
  %v1602 = vadd.f32 %v328, %v1601
  %v1603 = vpop.f32.mrf.mxu0
  %v1604 = vadd.f32 %v328, %v1603
  %1605 = vmatprep.mubr.bf16.mxu0 0
  %1606 = vmatmul.mubr.bf16.gmra.mxu0 %v1011
  %v1607 = vpop.f32.mrf.mxu0
  %v1608 = vadd.f32 %v333, %v1607
  %v1609 = vpop.f32.mrf.mxu0
  %v1610 = vadd.f32 %v333, %v1609
  %v1611 = vpop.f32.mrf.mxu0
  %v1612 = vadd.f32 %v338, %v1611
  %v1613 = vpop.f32.mrf.mxu0
  %v1614 = vadd.f32 %v338, %v1613
  %1615 = vdwg.mxu0
  %1616 = vmatprep.subr.bf16.mxu0 0
  %1617 = vmatpush1.bf16.xpose.msra.mxu0 %v1179
  %1618 = vmatprep.subr.bf16.mxu0 0
  %1619 = vmatpush1.bf16.xpose.msra.mxu0 %v1176
  %1620 = vmatprep.subr.bf16.mxu0 0
  %1621 = vmatpush1.bf16.xpose.msra.mxu0 %v1173
  %1622 = vmatprep.subr.bf16.mxu0 0
  %1623 = vmatpush1.bf16.xpose.msra.mxu0 %v1170
  %1624 = vmatprep.subr.bf16.mxu0 0
  %1625 = vmatpush1.bf16.xpose.msra.mxu0 %v1167
  %1626 = vmatprep.subr.bf16.mxu0 0
  %1627 = vmatpush1.bf16.xpose.msra.mxu0 %v1164
  %1628 = vmatprep.subr.bf16.mxu0 0
  %1629 = vmatpush1.bf16.xpose.msra.mxu0 %v1161
  %1630 = vmatprep.subr.bf16.mxu0 0
  %1631 = vmatpush1.bf16.xpose.msra.mxu0 %v1158
  %1632 = vmatprep.subr.bf16.mxu0 0
  %1633 = vmatpush2.bf16.xpose.msra.mxu0 %v1203
  %1634 = vmatprep.subr.bf16.mxu0 0
  %1635 = vmatpush2.bf16.xpose.msra.mxu0 %v1200
  %1636 = vmatprep.subr.bf16.mxu0 0
  %1637 = vmatpush2.bf16.xpose.msra.mxu0 %v1197
  %1638 = vmatprep.subr.bf16.mxu0 0
  %1639 = vmatpush2.bf16.xpose.msra.mxu0 %v1194
  %1640 = vmatprep.subr.bf16.mxu0 0
  %1641 = vmatpush2.bf16.xpose.msra.mxu0 %v1191
  %1642 = vmatprep.subr.bf16.mxu0 0
  %1643 = vmatpush2.bf16.xpose.msra.mxu0 %v1188
  %1644 = vmatprep.subr.bf16.mxu0 0
  %1645 = vmatpush2.bf16.xpose.msra.mxu0 %v1185
  %1646 = vmatprep.subr.bf16.mxu0 0
  %1647 = vmatpush2.bf16.xpose.msra.mxu0 %v1182
  %1648 = vmatprep.mubr.bf16.mxu0 0
  %1649 = vmatmul.mubr.bf16.gmra.mxu0 %v1002
  %v1650 = vpop.f32.mrf.mxu0
  %v1651 = vadd.f32 %v303, %v1650
  %v1652 = vpop.f32.mrf.mxu0
  %v1653 = vadd.f32 %v303, %v1652
  %v1654 = vpop.f32.mrf.mxu0
  %v1655 = vadd.f32 %v308, %v1654
  %v1656 = vpop.f32.mrf.mxu0
  %v1657 = vadd.f32 %v308, %v1656
  %1658 = vmatprep.mubr.bf16.mxu0 0
  %1659 = vmatmul.mubr.bf16.gmra.mxu0 %v1005
  %v1660 = vpop.f32.mrf.mxu0
  %v1661 = vadd.f32 %v313, %v1660
  %v1662 = vpop.f32.mrf.mxu0
  %v1663 = vadd.f32 %v313, %v1662
  %v1664 = vpop.f32.mrf.mxu0
  %v1665 = vadd.f32 %v318, %v1664
  %v1666 = vpop.f32.mrf.mxu0
  %v1667 = vadd.f32 %v318, %v1666
  %1668 = vmatprep.mubr.bf16.mxu0 0
  %1669 = vmatmul.mubr.bf16.gmra.mxu0 %v1008
  %v1670 = vpop.f32.mrf.mxu0
  %v1671 = vadd.f32 %v323, %v1670
  %v1672 = vpop.f32.mrf.mxu0
  %v1673 = vadd.f32 %v323, %v1672
  %v1674 = vpop.f32.mrf.mxu0
  %v1675 = vadd.f32 %v328, %v1674
  %v1676 = vpop.f32.mrf.mxu0
  %v1677 = vadd.f32 %v328, %v1676
  %1678 = vmatprep.mubr.bf16.mxu0 0
  %1679 = vmatmul.mubr.bf16.gmra.mxu0 %v1011
  %v1680 = vpop.f32.mrf.mxu0
  %v1681 = vadd.f32 %v333, %v1680
  %v1682 = vpop.f32.mrf.mxu0
  %v1683 = vadd.f32 %v333, %v1682
  %v1684 = vpop.f32.mrf.mxu0
  %v1685 = vadd.f32 %v338, %v1684
  %v1686 = vpop.f32.mrf.mxu0
  %v1687 = vadd.f32 %v338, %v1686
  %1688 = vdwg.mxu0
  %1689 = vmatprep.subr.bf16.mxu0 0
  %1690 = vmatpush1.bf16.xpose.msra.mxu0 %v1227
  %1691 = vmatprep.subr.bf16.mxu0 0
  %1692 = vmatpush1.bf16.xpose.msra.mxu0 %v1224
  %1693 = vmatprep.subr.bf16.mxu0 0
  %1694 = vmatpush1.bf16.xpose.msra.mxu0 %v1221
  %1695 = vmatprep.subr.bf16.mxu0 0
  %1696 = vmatpush1.bf16.xpose.msra.mxu0 %v1218
  %1697 = vmatprep.subr.bf16.mxu0 0
  %1698 = vmatpush1.bf16.xpose.msra.mxu0 %v1215
  %1699 = vmatprep.subr.bf16.mxu0 0
  %1700 = vmatpush1.bf16.xpose.msra.mxu0 %v1212
  %1701 = vmatprep.subr.bf16.mxu0 0
  %1702 = vmatpush1.bf16.xpose.msra.mxu0 %v1209
  %1703 = vmatprep.subr.bf16.mxu0 0
  %1704 = vmatpush1.bf16.xpose.msra.mxu0 %v1206
  %1705 = vmatprep.subr.bf16.mxu0 0
  %1706 = vmatpush2.bf16.xpose.msra.mxu0 %v1251
  %1707 = vmatprep.subr.bf16.mxu0 0
  %1708 = vmatpush2.bf16.xpose.msra.mxu0 %v1248
  %1709 = vmatprep.subr.bf16.mxu0 0
  %1710 = vmatpush2.bf16.xpose.msra.mxu0 %v1245
  %1711 = vmatprep.subr.bf16.mxu0 0
  %1712 = vmatpush2.bf16.xpose.msra.mxu0 %v1242
  %1713 = vmatprep.subr.bf16.mxu0 0
  %1714 = vmatpush2.bf16.xpose.msra.mxu0 %v1239
  %1715 = vmatprep.subr.bf16.mxu0 0
  %1716 = vmatpush2.bf16.xpose.msra.mxu0 %v1236
  %1717 = vmatprep.subr.bf16.mxu0 0
  %1718 = vmatpush2.bf16.xpose.msra.mxu0 %v1233
  %1719 = vmatprep.subr.bf16.mxu0 0
  %1720 = vmatpush2.bf16.xpose.msra.mxu0 %v1230
  %1721 = vmatprep.mubr.bf16.mxu0 0
  %1722 = vmatmul.mubr.bf16.gmra.mxu0 %v1002
  %v1723 = vpop.f32.mrf.mxu0
  %v1724 = vadd.f32 %v303, %v1723
  %v1725 = vpop.f32.mrf.mxu0
  %v1726 = vadd.f32 %v303, %v1725
  %v1727 = vpop.f32.mrf.mxu0
  %v1728 = vadd.f32 %v308, %v1727
  %v1729 = vpop.f32.mrf.mxu0
  %v1730 = vadd.f32 %v308, %v1729
  %1731 = vmatprep.mubr.bf16.mxu0 0
  %1732 = vmatmul.mubr.bf16.gmra.mxu0 %v1005
  %v1733 = vpop.f32.mrf.mxu0
  %v1734 = vadd.f32 %v313, %v1733
  %v1735 = vpop.f32.mrf.mxu0
  %v1736 = vadd.f32 %v313, %v1735
  %v1737 = vpop.f32.mrf.mxu0
  %v1738 = vadd.f32 %v318, %v1737
  %v1739 = vpop.f32.mrf.mxu0
  %v1740 = vadd.f32 %v318, %v1739
  %1741 = vmatprep.mubr.bf16.mxu0 0
  %1742 = vmatmul.mubr.bf16.gmra.mxu0 %v1008
  %v1743 = vpop.f32.mrf.mxu0
  %v1744 = vadd.f32 %v323, %v1743
  %v1745 = vpop.f32.mrf.mxu0
  %v1746 = vadd.f32 %v323, %v1745
  %v1747 = vpop.f32.mrf.mxu0
  %v1748 = vadd.f32 %v328, %v1747
  %v1749 = vpop.f32.mrf.mxu0
  %v1750 = vadd.f32 %v328, %v1749
  %1751 = vmatprep.mubr.bf16.mxu0 0
  %1752 = vmatmul.mubr.bf16.gmra.mxu0 %v1011
  %v1753 = vpop.f32.mrf.mxu0
  %v1754 = vadd.f32 %v333, %v1753
  %v1755 = vpop.f32.mrf.mxu0
  %v1756 = vadd.f32 %v333, %v1755
  %v1757 = vpop.f32.mrf.mxu0
  %v1758 = vadd.f32 %v338, %v1757
  %v1759 = vpop.f32.mrf.mxu0
  %v1760 = vadd.f32 %v338, %v1759
  %1761 = vdwg.mxu0
  %1762 = vmatprep.subr.bf16.mxu0 0
  %1763 = vmatpush1.bf16.xpose.msra.mxu0 %v1275
  %1764 = vmatprep.subr.bf16.mxu0 0
  %1765 = vmatpush1.bf16.xpose.msra.mxu0 %v1272
  %1766 = vmatprep.subr.bf16.mxu0 0
  %1767 = vmatpush1.bf16.xpose.msra.mxu0 %v1269
  %1768 = vmatprep.subr.bf16.mxu0 0
  %1769 = vmatpush1.bf16.xpose.msra.mxu0 %v1266
  %1770 = vmatprep.subr.bf16.mxu0 0
  %1771 = vmatpush1.bf16.xpose.msra.mxu0 %v1263
  %1772 = vmatprep.subr.bf16.mxu0 0
  %1773 = vmatpush1.bf16.xpose.msra.mxu0 %v1260
  %1774 = vmatprep.subr.bf16.mxu0 0
  %1775 = vmatpush1.bf16.xpose.msra.mxu0 %v1257
  %1776 = vmatprep.subr.bf16.mxu0 0
  %1777 = vmatpush1.bf16.xpose.msra.mxu0 %v1254
  %1778 = vmatprep.subr.bf16.mxu0 0
  %1779 = vmatpush2.bf16.xpose.msra.mxu0 %v1299
  %1780 = vmatprep.subr.bf16.mxu0 0
  %1781 = vmatpush2.bf16.xpose.msra.mxu0 %v1296
  %1782 = vmatprep.subr.bf16.mxu0 0
  %1783 = vmatpush2.bf16.xpose.msra.mxu0 %v1293
  %1784 = vmatprep.subr.bf16.mxu0 0
  %1785 = vmatpush2.bf16.xpose.msra.mxu0 %v1290
  %1786 = vmatprep.subr.bf16.mxu0 0
  %1787 = vmatpush2.bf16.xpose.msra.mxu0 %v1287
  %1788 = vmatprep.subr.bf16.mxu0 0
  %1789 = vmatpush2.bf16.xpose.msra.mxu0 %v1284
  %1790 = vmatprep.subr.bf16.mxu0 0
  %1791 = vmatpush2.bf16.xpose.msra.mxu0 %v1281
  %1792 = vmatprep.subr.bf16.mxu0 0
  %1793 = vmatpush2.bf16.xpose.msra.mxu0 %v1278
  %1794 = vmatprep.mubr.bf16.mxu0 0
  %1795 = vmatmul.mubr.bf16.gmra.mxu0 %v1002
  %v1796 = vpop.f32.mrf.mxu0
  %v1797 = vadd.f32 %v303, %v1796
  %v1798 = vpop.f32.mrf.mxu0
  %v1799 = vadd.f32 %v303, %v1798
  %v1800 = vpop.f32.mrf.mxu0
  %v1801 = vadd.f32 %v308, %v1800
  %v1802 = vpop.f32.mrf.mxu0
  %v1803 = vadd.f32 %v308, %v1802
  %1804 = vmatprep.mubr.bf16.mxu0 0
  %1805 = vmatmul.mubr.bf16.gmra.mxu0 %v1005
  %v1806 = vpop.f32.mrf.mxu0
  %v1807 = vadd.f32 %v313, %v1806
  %v1808 = vpop.f32.mrf.mxu0
  %v1809 = vadd.f32 %v313, %v1808
  %v1810 = vpop.f32.mrf.mxu0
  %v1811 = vadd.f32 %v318, %v1810
  %v1812 = vpop.f32.mrf.mxu0
  %v1813 = vadd.f32 %v318, %v1812
  %1814 = vmatprep.mubr.bf16.mxu0 0
  %1815 = vmatmul.mubr.bf16.gmra.mxu0 %v1008
  %v1816 = vpop.f32.mrf.mxu0
  %v1817 = vadd.f32 %v323, %v1816
  %v1818 = vpop.f32.mrf.mxu0
  %v1819 = vadd.f32 %v323, %v1818
  %v1820 = vpop.f32.mrf.mxu0
  %v1821 = vadd.f32 %v328, %v1820
  %v1822 = vpop.f32.mrf.mxu0
  %v1823 = vadd.f32 %v328, %v1822
  %1824 = vmatprep.mubr.bf16.mxu0 0
  %1825 = vmatmul.mubr.bf16.gmra.mxu0 %v1011
  %v1826 = vpop.f32.mrf.mxu0
  %v1827 = vadd.f32 %v333, %v1826
  %v1828 = vpop.f32.mrf.mxu0
  %v1829 = vadd.f32 %v333, %v1828
  %v1830 = vpop.f32.mrf.mxu0
  %v1831 = vadd.f32 %v338, %v1830
  %v1832 = vpop.f32.mrf.mxu0
  %v1833 = vadd.f32 %v338, %v1832
  %1834 = vdwg.mxu0
  %1835 = vmatprep.subr.bf16.mxu0 0
  %1836 = vmatpush1.bf16.xpose.msra.mxu0 %v1323
  %1837 = vmatprep.subr.bf16.mxu0 0
  %1838 = vmatpush1.bf16.xpose.msra.mxu0 %v1320
  %1839 = vmatprep.subr.bf16.mxu0 0
  %1840 = vmatpush1.bf16.xpose.msra.mxu0 %v1317
  %1841 = vmatprep.subr.bf16.mxu0 0
  %1842 = vmatpush1.bf16.xpose.msra.mxu0 %v1314
  %1843 = vmatprep.subr.bf16.mxu0 0
  %1844 = vmatpush1.bf16.xpose.msra.mxu0 %v1311
  %1845 = vmatprep.subr.bf16.mxu0 0
  %1846 = vmatpush1.bf16.xpose.msra.mxu0 %v1308
  %1847 = vmatprep.subr.bf16.mxu0 0
  %1848 = vmatpush1.bf16.xpose.msra.mxu0 %v1305
  %1849 = vmatprep.subr.bf16.mxu0 0
  %1850 = vmatpush1.bf16.xpose.msra.mxu0 %v1302
  %1851 = vmatprep.subr.bf16.mxu0 0
  %1852 = vmatpush2.bf16.xpose.msra.mxu0 %v1347
  %1853 = vmatprep.subr.bf16.mxu0 0
  %1854 = vmatpush2.bf16.xpose.msra.mxu0 %v1344
  %1855 = vmatprep.subr.bf16.mxu0 0
  %1856 = vmatpush2.bf16.xpose.msra.mxu0 %v1341
  %1857 = vmatprep.subr.bf16.mxu0 0
  %1858 = vmatpush2.bf16.xpose.msra.mxu0 %v1338
  %1859 = vmatprep.subr.bf16.mxu0 0
  %1860 = vmatpush2.bf16.xpose.msra.mxu0 %v1335
  %1861 = vmatprep.subr.bf16.mxu0 0
  %1862 = vmatpush2.bf16.xpose.msra.mxu0 %v1332
  %1863 = vmatprep.subr.bf16.mxu0 0
  %1864 = vmatpush2.bf16.xpose.msra.mxu0 %v1329
  %1865 = vmatprep.subr.bf16.mxu0 0
  %1866 = vmatpush2.bf16.xpose.msra.mxu0 %v1326
  %1867 = vmatprep.mubr.bf16.mxu0 0
  %1868 = vmatmul.mubr.bf16.gmra.mxu0 %v1002
  %v1869 = vpop.f32.mrf.mxu0
  %v1870 = vadd.f32 %v303, %v1869
  %v1871 = vpop.f32.mrf.mxu0
  %v1872 = vadd.f32 %v303, %v1871
  %v1873 = vpop.f32.mrf.mxu0
  %v1874 = vadd.f32 %v308, %v1873
  %v1875 = vpop.f32.mrf.mxu0
  %v1876 = vadd.f32 %v308, %v1875
  %1877 = vmatprep.mubr.bf16.mxu0 0
  %1878 = vmatmul.mubr.bf16.gmra.mxu0 %v1005
  %v1879 = vpop.f32.mrf.mxu0
  %v1880 = vadd.f32 %v313, %v1879
  %v1881 = vpop.f32.mrf.mxu0
  %v1882 = vadd.f32 %v313, %v1881
  %v1883 = vpop.f32.mrf.mxu0
  %v1884 = vadd.f32 %v318, %v1883
  %v1885 = vpop.f32.mrf.mxu0
  %v1886 = vadd.f32 %v318, %v1885
  %1887 = vmatprep.mubr.bf16.mxu0 0
  %1888 = vmatmul.mubr.bf16.gmra.mxu0 %v1008
  %v1889 = vpop.f32.mrf.mxu0
  %v1890 = vadd.f32 %v323, %v1889
  %v1891 = vpop.f32.mrf.mxu0
  %v1892 = vadd.f32 %v323, %v1891
  %v1893 = vpop.f32.mrf.mxu0
  %v1894 = vadd.f32 %v328, %v1893
  %v1895 = vpop.f32.mrf.mxu0
  %v1896 = vadd.f32 %v328, %v1895
  %1897 = vmatprep.mubr.bf16.mxu0 0
  %1898 = vmatmul.mubr.bf16.gmra.mxu0 %v1011
  %v1899 = vpop.f32.mrf.mxu0
  %v1900 = vadd.f32 %v333, %v1899
  %v1901 = vpop.f32.mrf.mxu0
  %v1902 = vadd.f32 %v333, %v1901
  %v1903 = vpop.f32.mrf.mxu0
  %v1904 = vadd.f32 %v338, %v1903
  %v1905 = vpop.f32.mrf.mxu0
  %v1906 = vadd.f32 %v338, %v1905
  %1907 = vdwg.mxu0
  %1908 = vmatprep.subr.bf16.mxu0 0
  %1909 = vmatpush1.bf16.xpose.msra.mxu0 %v1371
  %1910 = vmatprep.subr.bf16.mxu0 0
  %1911 = vmatpush1.bf16.xpose.msra.mxu0 %v1368
  %1912 = vmatprep.subr.bf16.mxu0 0
  %1913 = vmatpush1.bf16.xpose.msra.mxu0 %v1365
  %1914 = vmatprep.subr.bf16.mxu0 0
  %1915 = vmatpush1.bf16.xpose.msra.mxu0 %v1362
  %1916 = vmatprep.subr.bf16.mxu0 0
  %1917 = vmatpush1.bf16.xpose.msra.mxu0 %v1359
  %1918 = vmatprep.subr.bf16.mxu0 0
  %1919 = vmatpush1.bf16.xpose.msra.mxu0 %v1356
  %1920 = vmatprep.subr.bf16.mxu0 0
  %1921 = vmatpush1.bf16.xpose.msra.mxu0 %v1353
  %1922 = vmatprep.subr.bf16.mxu0 0
  %1923 = vmatpush1.bf16.xpose.msra.mxu0 %v1350
  %1924 = vmatprep.subr.bf16.mxu0 0
  %1925 = vmatpush2.bf16.xpose.msra.mxu0 %v1395
  %1926 = vmatprep.subr.bf16.mxu0 0
  %1927 = vmatpush2.bf16.xpose.msra.mxu0 %v1392
  %1928 = vmatprep.subr.bf16.mxu0 0
  %1929 = vmatpush2.bf16.xpose.msra.mxu0 %v1389
  %1930 = vmatprep.subr.bf16.mxu0 0
  %1931 = vmatpush2.bf16.xpose.msra.mxu0 %v1386
  %1932 = vmatprep.subr.bf16.mxu0 0
  %1933 = vmatpush2.bf16.xpose.msra.mxu0 %v1383
  %1934 = vmatprep.subr.bf16.mxu0 0
  %1935 = vmatpush2.bf16.xpose.msra.mxu0 %v1380
  %1936 = vmatprep.subr.bf16.mxu0 0
  %1937 = vmatpush2.bf16.xpose.msra.mxu0 %v1377
  %1938 = vmatprep.subr.bf16.mxu0 0
  %1939 = vmatpush2.bf16.xpose.msra.mxu0 %v1374
  %1940 = vmatprep.mubr.bf16.mxu0 0
  %1941 = vmatmul.mubr.bf16.gmra.mxu0 %v1002
  %v1942 = vpop.f32.mrf.mxu0
  %v1943 = vadd.f32 %v303, %v1942
  %v1944 = vpop.f32.mrf.mxu0
  %v1945 = vadd.f32 %v303, %v1944
  %v1946 = vpop.f32.mrf.mxu0
  %v1947 = vadd.f32 %v308, %v1946
  %v1948 = vpop.f32.mrf.mxu0
  %v1949 = vadd.f32 %v308, %v1948
  %1950 = vmatprep.mubr.bf16.mxu0 0
  %1951 = vmatmul.mubr.bf16.gmra.mxu0 %v1005
  %v1952 = vpop.f32.mrf.mxu0
  %v1953 = vadd.f32 %v313, %v1952
  %v1954 = vpop.f32.mrf.mxu0
  %v1955 = vadd.f32 %v313, %v1954
  %v1956 = vpop.f32.mrf.mxu0
  %v1957 = vadd.f32 %v318, %v1956
  %v1958 = vpop.f32.mrf.mxu0
  %v1959 = vadd.f32 %v318, %v1958
  %1960 = vmatprep.mubr.bf16.mxu0 0
  %1961 = vmatmul.mubr.bf16.gmra.mxu0 %v1008
  %v1962 = vpop.f32.mrf.mxu0
  %v1963 = vadd.f32 %v323, %v1962
  %v1964 = vpop.f32.mrf.mxu0
  %v1965 = vadd.f32 %v323, %v1964
  %v1966 = vpop.f32.mrf.mxu0
  %v1967 = vadd.f32 %v328, %v1966
  %v1968 = vpop.f32.mrf.mxu0
  %v1969 = vadd.f32 %v328, %v1968
  %1970 = vmatprep.mubr.bf16.mxu0 0
  %1971 = vmatmul.mubr.bf16.gmra.mxu0 %v1011
  %v1972 = vpop.f32.mrf.mxu0
  %v1973 = vadd.f32 %v333, %v1972
  %v1974 = vpop.f32.mrf.mxu0
  %v1975 = vadd.f32 %v333, %v1974
  %v1976 = vpop.f32.mrf.mxu0
  %v1977 = vadd.f32 %v338, %v1976
  %v1978 = vpop.f32.mrf.mxu0
  %v1979 = vadd.f32 %v338, %v1978
  %1980 = vdwg.mxu0
  %v1981 = vmax.f32 %v1432, 0.0
  %v1982 = vmax.f32 %v1434, 0.0
  %v1983 = vmax.f32 %v1505, 0.0
  %v1984 = vmax.f32 %v1507, 0.0
  %v1985 = vmax.f32 %v1578, 0.0
  %v1986 = vmax.f32 %v1580, 0.0
  %v1987 = vmax.f32 %v1651, 0.0
  %v1988 = vmax.f32 %v1653, 0.0
  %v1989 = vmax.f32 %v1724, 0.0
  %v1990 = vmax.f32 %v1726, 0.0
  %v1991 = vmax.f32 %v1797, 0.0
  %v1992 = vmax.f32 %v1799, 0.0
  %v1993 = vmax.f32 %v1870, 0.0
  %v1994 = vmax.f32 %v1872, 0.0
  %v1995 = vmax.f32 %v1943, 0.0
  %v1996 = vmax.f32 %v1945, 0.0
  %v1997 = vmax.f32 %v1436, 0.0
  %v1998 = vmax.f32 %v1438, 0.0
  %v1999 = vmax.f32 %v1509, 0.0
  %v2000 = vmax.f32 %v1511, 0.0
  %v2001 = vmax.f32 %v1582, 0.0
  %v2002 = vmax.f32 %v1584, 0.0
  %v2003 = vmax.f32 %v1655, 0.0
  %v2004 = vmax.f32 %v1657, 0.0
  %v2005 = vmax.f32 %v1728, 0.0
  %v2006 = vmax.f32 %v1730, 0.0
  %v2007 = vmax.f32 %v1801, 0.0
  %v2008 = vmax.f32 %v1803, 0.0
  %v2009 = vmax.f32 %v1874, 0.0
  %v2010 = vmax.f32 %v1876, 0.0
  %v2011 = vmax.f32 %v1947, 0.0
  %v2012 = vmax.f32 %v1949, 0.0
  %v2013 = vmax.f32 %v1442, 0.0
  %v2014 = vmax.f32 %v1444, 0.0
  %v2015 = vmax.f32 %v1515, 0.0
  %v2016 = vmax.f32 %v1517, 0.0
  %v2017 = vmax.f32 %v1588, 0.0
  %v2018 = vmax.f32 %v1590, 0.0
  %v2019 = vmax.f32 %v1661, 0.0
  %v2020 = vmax.f32 %v1663, 0.0
  %v2021 = vmax.f32 %v1734, 0.0
  %v2022 = vmax.f32 %v1736, 0.0
  %v2023 = vmax.f32 %v1807, 0.0
  %v2024 = vmax.f32 %v1809, 0.0
  %v2025 = vmax.f32 %v1880, 0.0
  %v2026 = vmax.f32 %v1882, 0.0
  %v2027 = vmax.f32 %v1953, 0.0
  %v2028 = vmax.f32 %v1955, 0.0
  %v2029 = vmax.f32 %v1446, 0.0
  %v2030 = vmax.f32 %v1448, 0.0
  %v2031 = vmax.f32 %v1519, 0.0
  %v2032 = vmax.f32 %v1521, 0.0
  %v2033 = vmax.f32 %v1592, 0.0
  %v2034 = vmax.f32 %v1594, 0.0
  %v2035 = vmax.f32 %v1665, 0.0
  %v2036 = vmax.f32 %v1667, 0.0
  %v2037 = vmax.f32 %v1738, 0.0
  %v2038 = vmax.f32 %v1740, 0.0
  %v2039 = vmax.f32 %v1811, 0.0
  %v2040 = vmax.f32 %v1813, 0.0
  %v2041 = vmax.f32 %v1884, 0.0
  %v2042 = vmax.f32 %v1886, 0.0
  %v2043 = vmax.f32 %v1957, 0.0
  %v2044 = vmax.f32 %v1959, 0.0
  %v2045 = vmax.f32 %v1452, 0.0
  %v2046 = vmax.f32 %v1454, 0.0
  %v2047 = vmax.f32 %v1525, 0.0
  %v2048 = vmax.f32 %v1527, 0.0
  %v2049 = vmax.f32 %v1598, 0.0
  %v2050 = vmax.f32 %v1600, 0.0
  %v2051 = vmax.f32 %v1671, 0.0
  %v2052 = vmax.f32 %v1673, 0.0
  %v2053 = vmax.f32 %v1744, 0.0
  %v2054 = vmax.f32 %v1746, 0.0
  %v2055 = vmax.f32 %v1817, 0.0
  %v2056 = vmax.f32 %v1819, 0.0
  %v2057 = vmax.f32 %v1890, 0.0
  %v2058 = vmax.f32 %v1892, 0.0
  %v2059 = vmax.f32 %v1963, 0.0
  %v2060 = vmax.f32 %v1965, 0.0
  %v2061 = vmax.f32 %v1456, 0.0
  %v2062 = vmax.f32 %v1458, 0.0
  %v2063 = vmax.f32 %v1529, 0.0
  %v2064 = vmax.f32 %v1531, 0.0
  %v2065 = vmax.f32 %v1602, 0.0
  %v2066 = vmax.f32 %v1604, 0.0
  %v2067 = vmax.f32 %v1675, 0.0
  %v2068 = vmax.f32 %v1677, 0.0
  %v2069 = vmax.f32 %v1748, 0.0
  %v2070 = vmax.f32 %v1750, 0.0
  %v2071 = vmax.f32 %v1821, 0.0
  %v2072 = vmax.f32 %v1823, 0.0
  %v2073 = vmax.f32 %v1894, 0.0
  %v2074 = vmax.f32 %v1896, 0.0
  %v2075 = vmax.f32 %v1967, 0.0
  %v2076 = vmax.f32 %v1969, 0.0
  %v2077 = vmax.f32 %v1462, 0.0
  %v2078 = vmax.f32 %v1464, 0.0
  %v2079 = vmax.f32 %v1535, 0.0
  %v2080 = vmax.f32 %v1537, 0.0
  %v2081 = vmax.f32 %v1608, 0.0
  %v2082 = vmax.f32 %v1610, 0.0
  %v2083 = vmax.f32 %v1681, 0.0
  %v2084 = vmax.f32 %v1683, 0.0
  %v2085 = vmax.f32 %v1754, 0.0
  %v2086 = vmax.f32 %v1756, 0.0
  %v2087 = vmax.f32 %v1827, 0.0
  %v2088 = vmax.f32 %v1829, 0.0
  %v2089 = vmax.f32 %v1900, 0.0
  %v2090 = vmax.f32 %v1902, 0.0
  %v2091 = vmax.f32 %v1973, 0.0
  %v2092 = vmax.f32 %v1975, 0.0
  %v2093 = vmax.f32 %v1466, 0.0
  %v2094 = vmax.f32 %v1468, 0.0
  %v2095 = vmax.f32 %v1539, 0.0
  %v2096 = vmax.f32 %v1541, 0.0
  %v2097 = vmax.f32 %v1612, 0.0
  %v2098 = vmax.f32 %v1614, 0.0
  %v2099 = vmax.f32 %v1685, 0.0
  %v2100 = vmax.f32 %v1687, 0.0
  %v2101 = vmax.f32 %v1758, 0.0
  %v2102 = vmax.f32 %v1760, 0.0
  %v2103 = vmax.f32 %v1831, 0.0
  %v2104 = vmax.f32 %v1833, 0.0
  %v2105 = vmax.f32 %v1904, 0.0
  %v2106 = vmax.f32 %v1906, 0.0
  %v2107 = vmax.f32 %v1977, 0.0
  %v2108 = vmax.f32 %v1979, 0.0
  %v2109 = vld [vmem:[%s3] sm:$0xf]
  %v2110 = vld [vmem:[%s3 + $0x4] sm:$0xf]
  %v2111 = vld [vmem:[%s3 + $0x8] sm:$0xf]
  %v2112 = vld [vmem:[%s3 + $0xc] sm:$0xf]
  %v2113 = vpack.c.bf16 %v1997, %v1981
  %v2114 = vpack.c.bf16 %v1998, %v1982
  %v2115 = vpack.c.bf16 %v1999, %v1983
  %v2116 = vpack.c.bf16 %v2000, %v1984
  %v2117 = vpack.c.bf16 %v2001, %v1985
  %v2118 = vpack.c.bf16 %v2002, %v1986
  %v2119 = vpack.c.bf16 %v2003, %v1987
  %v2120 = vpack.c.bf16 %v2004, %v1988
  %v2121 = vpack.c.bf16 %v2005, %v1989
  %v2122 = vpack.c.bf16 %v2006, %v1990
  %v2123 = vpack.c.bf16 %v2007, %v1991
  %v2124 = vpack.c.bf16 %v2008, %v1992
  %v2125 = vpack.c.bf16 %v2009, %v1993
  %v2126 = vpack.c.bf16 %v2010, %v1994
  %v2127 = vpack.c.bf16 %v2011, %v1995
  %v2128 = vpack.c.bf16 %v2012, %v1996
  %v2129 = vpack.c.bf16 %v2029, %v2013
  %v2130 = vpack.c.bf16 %v2030, %v2014
  %v2131 = vpack.c.bf16 %v2031, %v2015
  %v2132 = vpack.c.bf16 %v2032, %v2016
  %v2133 = vpack.c.bf16 %v2033, %v2017
  %v2134 = vpack.c.bf16 %v2034, %v2018
  %v2135 = vpack.c.bf16 %v2035, %v2019
  %v2136 = vpack.c.bf16 %v2036, %v2020
  %v2137 = vpack.c.bf16 %v2037, %v2021
  %v2138 = vpack.c.bf16 %v2038, %v2022
  %v2139 = vpack.c.bf16 %v2039, %v2023
  %v2140 = vpack.c.bf16 %v2040, %v2024
  %v2141 = vpack.c.bf16 %v2041, %v2025
  %v2142 = vpack.c.bf16 %v2042, %v2026
  %v2143 = vpack.c.bf16 %v2043, %v2027
  %v2144 = vpack.c.bf16 %v2044, %v2028
  %v2145 = vpack.c.bf16 %v2061, %v2045
  %v2146 = vpack.c.bf16 %v2062, %v2046
  %v2147 = vpack.c.bf16 %v2063, %v2047
  %v2148 = vpack.c.bf16 %v2064, %v2048
  %v2149 = vpack.c.bf16 %v2065, %v2049
  %v2150 = vpack.c.bf16 %v2066, %v2050
  %v2151 = vpack.c.bf16 %v2067, %v2051
  %v2152 = vpack.c.bf16 %v2068, %v2052
  %v2153 = vpack.c.bf16 %v2069, %v2053
  %v2154 = vpack.c.bf16 %v2070, %v2054
  %v2155 = vpack.c.bf16 %v2071, %v2055
  %v2156 = vpack.c.bf16 %v2072, %v2056
  %v2157 = vpack.c.bf16 %v2073, %v2057
  %v2158 = vpack.c.bf16 %v2074, %v2058
  %v2159 = vpack.c.bf16 %v2075, %v2059
  %v2160 = vpack.c.bf16 %v2076, %v2060
  %v2161 = vpack.c.bf16 %v2093, %v2077
  %v2162 = vpack.c.bf16 %v2094, %v2078
  %v2163 = vpack.c.bf16 %v2095, %v2079
  %v2164 = vpack.c.bf16 %v2096, %v2080
  %v2165 = vpack.c.bf16 %v2097, %v2081
  %v2166 = vpack.c.bf16 %v2098, %v2082
  %v2167 = vpack.c.bf16 %v2099, %v2083
  %v2168 = vpack.c.bf16 %v2100, %v2084
  %v2169 = vpack.c.bf16 %v2101, %v2085
  %v2170 = vpack.c.bf16 %v2102, %v2086
  %v2171 = vpack.c.bf16 %v2103, %v2087
  %v2172 = vpack.c.bf16 %v2104, %v2088
  %v2173 = vpack.c.bf16 %v2105, %v2089
  %v2174 = vpack.c.bf16 %v2106, %v2090
  %v2175 = vpack.c.bf16 %v2107, %v2091
  %v2176 = vpack.c.bf16 %v2108, %v2092
  %v2177 = vld [vmem:[%s4] sm:$0xff]
  %v2178 = vld [vmem:[%s4 + $0x8] sm:$0xff]
  %v2179 = vld [vmem:[%s4 + $0x10] sm:$0xff]
  %v2180 = vld [vmem:[%s4 + $0x18] sm:$0xff]
  %2182 = vset.pattern.permute.xlu0 0
  %2183 = vperm.xlu0 %2182, %v2177
  %v2184 = vpop.permute.xlu0 %2183
  %2187 = vset.pattern.permute.xlu0 0
  %2188 = vperm.xlu0 %2187, %v2178
  %v2189 = vpop.permute.xlu0 %2188
  %2192 = vset.pattern.permute.xlu0 0
  %2193 = vperm.xlu0 %2192, %v2179
  %v2194 = vpop.permute.xlu0 %2193
  %2197 = vset.pattern.permute.xlu0 0
  %2198 = vperm.xlu0 %2197, %v2180
  %v2199 = vpop.permute.xlu0 %2198
  %v2205 = vunpack.c.l.b16 %v2109
  %v2206 = vunpack.c.l.b16 %v2110
  %v2207 = vunpack.c.l.b16 %v2111
  %v2208 = vunpack.c.l.b16 %v2112
  %v2209 = vpack.c.b16 %v2206, %v2205
  %v2210 = vpack.c.b16 %v2208, %v2207
  %vm2211 = vcmask 523264
  %v2213 = vsel %vm2211, %v2209, 0
  %v2216 = vsel %vm2211, %v2210, 0
  %2218 = vmatprep.subr.bf16.mxu0 0
  %2219 = vmatpush1.bf16.msra.mxu0 0
  %2220 = vmatprep.subr.bf16.mxu0 0
  %2221 = vmatpush1.bf16.msra.mxu0 0
  %2222 = vmatprep.subr.bf16.mxu0 0
  %2223 = vmatpush1.bf16.msra.mxu0 0
  %2224 = vmatprep.subr.bf16.mxu0 0
  %2225 = vmatpush1.bf16.msra.mxu0 0
  %2226 = vmatprep.subr.bf16.mxu0 %v2162
  %2227 = vmatpush1.bf16.msra.mxu0 %v2161
  %2228 = vmatprep.subr.bf16.mxu0 %v2146
  %2229 = vmatpush1.bf16.msra.mxu0 %v2145
  %2230 = vmatprep.subr.bf16.mxu0 %v2130
  %2231 = vmatpush1.bf16.msra.mxu0 %v2129
  %2232 = vmatprep.subr.bf16.mxu0 %v2114
  %2233 = vmatpush1.bf16.msra.mxu0 %v2113
  %2234 = vmatprep.subr.bf16.mxu0 0
  %2235 = vmatpush2.bf16.msra.mxu0 0
  %2236 = vmatprep.subr.bf16.mxu0 0
  %2237 = vmatpush2.bf16.msra.mxu0 0
  %2238 = vmatprep.subr.bf16.mxu0 0
  %2239 = vmatpush2.bf16.msra.mxu0 0
  %2240 = vmatprep.subr.bf16.mxu0 0
  %2241 = vmatpush2.bf16.msra.mxu0 0
  %2242 = vmatprep.subr.bf16.mxu0 0
  %2243 = vmatpush2.bf16.msra.mxu0 0
  %2244 = vmatprep.subr.bf16.mxu0 0
  %2245 = vmatpush2.bf16.msra.mxu0 0
  %2246 = vmatprep.subr.bf16.mxu0 0
  %2247 = vmatpush2.bf16.msra.mxu0 0
  %2248 = vmatprep.subr.bf16.mxu0 0
  %2249 = vmatpush2.bf16.msra.mxu0 0
  %2250 = vmatprep.mubr.bf16.mxu0 0
  %2251 = vmatmul.mubr.bf16.gmra.mxu0 %v2213
  %v2252 = vpop.f32.mrf.mxu0
  %v2253 = vadd.f32 %v2184, %v2252
  %v2254 = vpop.f32.mrf.mxu0
  %v2255 = vadd.f32 %v2184, %v2254
  %v2256 = vpop.f32.mrf.mxu0
  %v2257 = vadd.f32 %v2189, %v2256
  %v2258 = vpop.f32.mrf.mxu0
  %v2259 = vadd.f32 %v2189, %v2258
  %2260 = vmatprep.mubr.bf16.mxu0 0
  %2261 = vmatmul.mubr.bf16.gmra.mxu0 %v2216
  %v2262 = vpop.f32.mrf.mxu0
  %v2263 = vadd.f32 %v2194, %v2262
  %v2264 = vpop.f32.mrf.mxu0
  %v2265 = vadd.f32 %v2194, %v2264
  %v2266 = vpop.f32.mrf.mxu0
  %v2267 = vadd.f32 %v2199, %v2266
  %v2268 = vpop.f32.mrf.mxu0
  %v2269 = vadd.f32 %v2199, %v2268
  %2270 = vdwg.mxu0
  %2271 = vmatprep.subr.bf16.mxu0 0
  %2272 = vmatpush1.bf16.msra.mxu0 0
  %2273 = vmatprep.subr.bf16.mxu0 0
  %2274 = vmatpush1.bf16.msra.mxu0 0
  %2275 = vmatprep.subr.bf16.mxu0 0
  %2276 = vmatpush1.bf16.msra.mxu0 0
  %2277 = vmatprep.subr.bf16.mxu0 0
  %2278 = vmatpush1.bf16.msra.mxu0 0
  %2279 = vmatprep.subr.bf16.mxu0 %v2164
  %2280 = vmatpush1.bf16.msra.mxu0 %v2163
  %2281 = vmatprep.subr.bf16.mxu0 %v2148
  %2282 = vmatpush1.bf16.msra.mxu0 %v2147
  %2283 = vmatprep.subr.bf16.mxu0 %v2132
  %2284 = vmatpush1.bf16.msra.mxu0 %v2131
  %2285 = vmatprep.subr.bf16.mxu0 %v2116
  %2286 = vmatpush1.bf16.msra.mxu0 %v2115
  %2287 = vmatprep.subr.bf16.mxu0 0
  %2288 = vmatpush2.bf16.msra.mxu0 0
  %2289 = vmatprep.subr.bf16.mxu0 0
  %2290 = vmatpush2.bf16.msra.mxu0 0
  %2291 = vmatprep.subr.bf16.mxu0 0
  %2292 = vmatpush2.bf16.msra.mxu0 0
  %2293 = vmatprep.subr.bf16.mxu0 0
  %2294 = vmatpush2.bf16.msra.mxu0 0
  %2295 = vmatprep.subr.bf16.mxu0 0
  %2296 = vmatpush2.bf16.msra.mxu0 0
  %2297 = vmatprep.subr.bf16.mxu0 0
  %2298 = vmatpush2.bf16.msra.mxu0 0
  %2299 = vmatprep.subr.bf16.mxu0 0
  %2300 = vmatpush2.bf16.msra.mxu0 0
  %2301 = vmatprep.subr.bf16.mxu0 0
  %2302 = vmatpush2.bf16.msra.mxu0 0
  %2303 = vmatprep.mubr.bf16.mxu0 0
  %2304 = vmatmul.mubr.bf16.gmra.mxu0 %v2213
  %v2305 = vpop.f32.mrf.mxu0
  %v2306 = vadd.f32 %v2184, %v2305
  %v2307 = vpop.f32.mrf.mxu0
  %v2308 = vadd.f32 %v2184, %v2307
  %v2309 = vpop.f32.mrf.mxu0
  %v2310 = vadd.f32 %v2189, %v2309
  %v2311 = vpop.f32.mrf.mxu0
  %v2312 = vadd.f32 %v2189, %v2311
  %2313 = vmatprep.mubr.bf16.mxu0 0
  %2314 = vmatmul.mubr.bf16.gmra.mxu0 %v2216
  %v2315 = vpop.f32.mrf.mxu0
  %v2316 = vadd.f32 %v2194, %v2315
  %v2317 = vpop.f32.mrf.mxu0
  %v2318 = vadd.f32 %v2194, %v2317
  %v2319 = vpop.f32.mrf.mxu0
  %v2320 = vadd.f32 %v2199, %v2319
  %v2321 = vpop.f32.mrf.mxu0
  %v2322 = vadd.f32 %v2199, %v2321
  %2323 = vdwg.mxu0
  %2324 = vmatprep.subr.bf16.mxu0 0
  %2325 = vmatpush1.bf16.msra.mxu0 0
  %2326 = vmatprep.subr.bf16.mxu0 0
  %2327 = vmatpush1.bf16.msra.mxu0 0
  %2328 = vmatprep.subr.bf16.mxu0 0
  %2329 = vmatpush1.bf16.msra.mxu0 0
  %2330 = vmatprep.subr.bf16.mxu0 0
  %2331 = vmatpush1.bf16.msra.mxu0 0
  %2332 = vmatprep.subr.bf16.mxu0 %v2166
  %2333 = vmatpush1.bf16.msra.mxu0 %v2165
  %2334 = vmatprep.subr.bf16.mxu0 %v2150
  %2335 = vmatpush1.bf16.msra.mxu0 %v2149
  %2336 = vmatprep.subr.bf16.mxu0 %v2134
  %2337 = vmatpush1.bf16.msra.mxu0 %v2133
  %2338 = vmatprep.subr.bf16.mxu0 %v2118
  %2339 = vmatpush1.bf16.msra.mxu0 %v2117
  %2340 = vmatprep.subr.bf16.mxu0 0
  %2341 = vmatpush2.bf16.msra.mxu0 0
  %2342 = vmatprep.subr.bf16.mxu0 0
  %2343 = vmatpush2.bf16.msra.mxu0 0
  %2344 = vmatprep.subr.bf16.mxu0 0
  %2345 = vmatpush2.bf16.msra.mxu0 0
  %2346 = vmatprep.subr.bf16.mxu0 0
  %2347 = vmatpush2.bf16.msra.mxu0 0
  %2348 = vmatprep.subr.bf16.mxu0 0
  %2349 = vmatpush2.bf16.msra.mxu0 0
  %2350 = vmatprep.subr.bf16.mxu0 0
  %2351 = vmatpush2.bf16.msra.mxu0 0
  %2352 = vmatprep.subr.bf16.mxu0 0
  %2353 = vmatpush2.bf16.msra.mxu0 0
  %2354 = vmatprep.subr.bf16.mxu0 0
  %2355 = vmatpush2.bf16.msra.mxu0 0
  %2356 = vmatprep.mubr.bf16.mxu0 0
  %2357 = vmatmul.mubr.bf16.gmra.mxu0 %v2213
  %v2358 = vpop.f32.mrf.mxu0
  %v2359 = vadd.f32 %v2184, %v2358
  %v2360 = vpop.f32.mrf.mxu0
  %v2361 = vadd.f32 %v2184, %v2360
  %v2362 = vpop.f32.mrf.mxu0
  %v2363 = vadd.f32 %v2189, %v2362
  %v2364 = vpop.f32.mrf.mxu0
  %v2365 = vadd.f32 %v2189, %v2364
  %2366 = vmatprep.mubr.bf16.mxu0 0
  %2367 = vmatmul.mubr.bf16.gmra.mxu0 %v2216
  %v2368 = vpop.f32.mrf.mxu0
  %v2369 = vadd.f32 %v2194, %v2368
  %v2370 = vpop.f32.mrf.mxu0
  %v2371 = vadd.f32 %v2194, %v2370
  %v2372 = vpop.f32.mrf.mxu0
  %v2373 = vadd.f32 %v2199, %v2372
  %v2374 = vpop.f32.mrf.mxu0
  %v2375 = vadd.f32 %v2199, %v2374
  %2376 = vdwg.mxu0
  %2377 = vmatprep.subr.bf16.mxu0 0
  %2378 = vmatpush1.bf16.msra.mxu0 0
  %2379 = vmatprep.subr.bf16.mxu0 0
  %2380 = vmatpush1.bf16.msra.mxu0 0
  %2381 = vmatprep.subr.bf16.mxu0 0
  %2382 = vmatpush1.bf16.msra.mxu0 0
  %2383 = vmatprep.subr.bf16.mxu0 0
  %2384 = vmatpush1.bf16.msra.mxu0 0
  %2385 = vmatprep.subr.bf16.mxu0 %v2168
  %2386 = vmatpush1.bf16.msra.mxu0 %v2167
  %2387 = vmatprep.subr.bf16.mxu0 %v2152
  %2388 = vmatpush1.bf16.msra.mxu0 %v2151
  %2389 = vmatprep.subr.bf16.mxu0 %v2136
  %2390 = vmatpush1.bf16.msra.mxu0 %v2135
  %2391 = vmatprep.subr.bf16.mxu0 %v2120
  %2392 = vmatpush1.bf16.msra.mxu0 %v2119
  %2393 = vmatprep.subr.bf16.mxu0 0
  %2394 = vmatpush2.bf16.msra.mxu0 0
  %2395 = vmatprep.subr.bf16.mxu0 0
  %2396 = vmatpush2.bf16.msra.mxu0 0
  %2397 = vmatprep.subr.bf16.mxu0 0
  %2398 = vmatpush2.bf16.msra.mxu0 0
  %2399 = vmatprep.subr.bf16.mxu0 0
  %2400 = vmatpush2.bf16.msra.mxu0 0
  %2401 = vmatprep.subr.bf16.mxu0 0
  %2402 = vmatpush2.bf16.msra.mxu0 0
  %2403 = vmatprep.subr.bf16.mxu0 0
  %2404 = vmatpush2.bf16.msra.mxu0 0
  %2405 = vmatprep.subr.bf16.mxu0 0
  %2406 = vmatpush2.bf16.msra.mxu0 0
  %2407 = vmatprep.subr.bf16.mxu0 0
  %2408 = vmatpush2.bf16.msra.mxu0 0
  %2409 = vmatprep.mubr.bf16.mxu0 0
  %2410 = vmatmul.mubr.bf16.gmra.mxu0 %v2213
  %v2411 = vpop.f32.mrf.mxu0
  %v2412 = vadd.f32 %v2184, %v2411
  %v2413 = vpop.f32.mrf.mxu0
  %v2414 = vadd.f32 %v2184, %v2413
  %v2415 = vpop.f32.mrf.mxu0
  %v2416 = vadd.f32 %v2189, %v2415
  %v2417 = vpop.f32.mrf.mxu0
  %v2418 = vadd.f32 %v2189, %v2417
  %2419 = vmatprep.mubr.bf16.mxu0 0
  %2420 = vmatmul.mubr.bf16.gmra.mxu0 %v2216
  %v2421 = vpop.f32.mrf.mxu0
  %v2422 = vadd.f32 %v2194, %v2421
  %v2423 = vpop.f32.mrf.mxu0
  %v2424 = vadd.f32 %v2194, %v2423
  %v2425 = vpop.f32.mrf.mxu0
  %v2426 = vadd.f32 %v2199, %v2425
  %v2427 = vpop.f32.mrf.mxu0
  %v2428 = vadd.f32 %v2199, %v2427
  %2429 = vdwg.mxu0
  %2430 = vmatprep.subr.bf16.mxu0 0
  %2431 = vmatpush1.bf16.msra.mxu0 0
  %2432 = vmatprep.subr.bf16.mxu0 0
  %2433 = vmatpush1.bf16.msra.mxu0 0
  %2434 = vmatprep.subr.bf16.mxu0 0
  %2435 = vmatpush1.bf16.msra.mxu0 0
  %2436 = vmatprep.subr.bf16.mxu0 0
  %2437 = vmatpush1.bf16.msra.mxu0 0
  %2438 = vmatprep.subr.bf16.mxu0 %v2170
  %2439 = vmatpush1.bf16.msra.mxu0 %v2169
  %2440 = vmatprep.subr.bf16.mxu0 %v2154
  %2441 = vmatpush1.bf16.msra.mxu0 %v2153
  %2442 = vmatprep.subr.bf16.mxu0 %v2138
  %2443 = vmatpush1.bf16.msra.mxu0 %v2137
  %2444 = vmatprep.subr.bf16.mxu0 %v2122
  %2445 = vmatpush1.bf16.msra.mxu0 %v2121
  %2446 = vmatprep.subr.bf16.mxu0 0
  %2447 = vmatpush2.bf16.msra.mxu0 0
  %2448 = vmatprep.subr.bf16.mxu0 0
  %2449 = vmatpush2.bf16.msra.mxu0 0
  %2450 = vmatprep.subr.bf16.mxu0 0
  %2451 = vmatpush2.bf16.msra.mxu0 0
  %2452 = vmatprep.subr.bf16.mxu0 0
  %2453 = vmatpush2.bf16.msra.mxu0 0
  %2454 = vmatprep.subr.bf16.mxu0 0
  %2455 = vmatpush2.bf16.msra.mxu0 0
  %2456 = vmatprep.subr.bf16.mxu0 0
  %2457 = vmatpush2.bf16.msra.mxu0 0
  %2458 = vmatprep.subr.bf16.mxu0 0
  %2459 = vmatpush2.bf16.msra.mxu0 0
  %2460 = vmatprep.subr.bf16.mxu0 0
  %2461 = vmatpush2.bf16.msra.mxu0 0
  %2462 = vmatprep.mubr.bf16.mxu0 0
  %2463 = vmatmul.mubr.bf16.gmra.mxu0 %v2213
  %v2464 = vpop.f32.mrf.mxu0
  %v2465 = vadd.f32 %v2184, %v2464
  %v2466 = vpop.f32.mrf.mxu0
  %v2467 = vadd.f32 %v2184, %v2466
  %v2468 = vpop.f32.mrf.mxu0
  %v2469 = vadd.f32 %v2189, %v2468
  %v2470 = vpop.f32.mrf.mxu0
  %v2471 = vadd.f32 %v2189, %v2470
  %2472 = vmatprep.mubr.bf16.mxu0 0
  %2473 = vmatmul.mubr.bf16.gmra.mxu0 %v2216
  %v2474 = vpop.f32.mrf.mxu0
  %v2475 = vadd.f32 %v2194, %v2474
  %v2476 = vpop.f32.mrf.mxu0
  %v2477 = vadd.f32 %v2194, %v2476
  %v2478 = vpop.f32.mrf.mxu0
  %v2479 = vadd.f32 %v2199, %v2478
  %v2480 = vpop.f32.mrf.mxu0
  %v2481 = vadd.f32 %v2199, %v2480
  %2482 = vdwg.mxu0
  %2483 = vmatprep.subr.bf16.mxu0 0
  %2484 = vmatpush1.bf16.msra.mxu0 0
  %2485 = vmatprep.subr.bf16.mxu0 0
  %2486 = vmatpush1.bf16.msra.mxu0 0
  %2487 = vmatprep.subr.bf16.mxu0 0
  %2488 = vmatpush1.bf16.msra.mxu0 0
  %2489 = vmatprep.subr.bf16.mxu0 0
  %2490 = vmatpush1.bf16.msra.mxu0 0
  %2491 = vmatprep.subr.bf16.mxu0 %v2172
  %2492 = vmatpush1.bf16.msra.mxu0 %v2171
  %2493 = vmatprep.subr.bf16.mxu0 %v2156
  %2494 = vmatpush1.bf16.msra.mxu0 %v2155
  %2495 = vmatprep.subr.bf16.mxu0 %v2140
  %2496 = vmatpush1.bf16.msra.mxu0 %v2139
  %2497 = vmatprep.subr.bf16.mxu0 %v2124
  %2498 = vmatpush1.bf16.msra.mxu0 %v2123
  %2499 = vmatprep.subr.bf16.mxu0 0
  %2500 = vmatpush2.bf16.msra.mxu0 0
  %2501 = vmatprep.subr.bf16.mxu0 0
  %2502 = vmatpush2.bf16.msra.mxu0 0
  %2503 = vmatprep.subr.bf16.mxu0 0
  %2504 = vmatpush2.bf16.msra.mxu0 0
  %2505 = vmatprep.subr.bf16.mxu0 0
  %2506 = vmatpush2.bf16.msra.mxu0 0
  %2507 = vmatprep.subr.bf16.mxu0 0
  %2508 = vmatpush2.bf16.msra.mxu0 0
  %2509 = vmatprep.subr.bf16.mxu0 0
  %2510 = vmatpush2.bf16.msra.mxu0 0
  %2511 = vmatprep.subr.bf16.mxu0 0
  %2512 = vmatpush2.bf16.msra.mxu0 0
  %2513 = vmatprep.subr.bf16.mxu0 0
  %2514 = vmatpush2.bf16.msra.mxu0 0
  %2515 = vmatprep.mubr.bf16.mxu0 0
  %2516 = vmatmul.mubr.bf16.gmra.mxu0 %v2213
  %v2517 = vpop.f32.mrf.mxu0
  %v2518 = vadd.f32 %v2184, %v2517
  %v2519 = vpop.f32.mrf.mxu0
  %v2520 = vadd.f32 %v2184, %v2519
  %v2521 = vpop.f32.mrf.mxu0
  %v2522 = vadd.f32 %v2189, %v2521
  %v2523 = vpop.f32.mrf.mxu0
  %v2524 = vadd.f32 %v2189, %v2523
  %2525 = vmatprep.mubr.bf16.mxu0 0
  %2526 = vmatmul.mubr.bf16.gmra.mxu0 %v2216
  %v2527 = vpop.f32.mrf.mxu0
  %v2528 = vadd.f32 %v2194, %v2527
  %v2529 = vpop.f32.mrf.mxu0
  %v2530 = vadd.f32 %v2194, %v2529
  %v2531 = vpop.f32.mrf.mxu0
  %v2532 = vadd.f32 %v2199, %v2531
  %v2533 = vpop.f32.mrf.mxu0
  %v2534 = vadd.f32 %v2199, %v2533
  %2535 = vdwg.mxu0
  %2536 = vmatprep.subr.bf16.mxu0 0
  %2537 = vmatpush1.bf16.msra.mxu0 0
  %2538 = vmatprep.subr.bf16.mxu0 0
  %2539 = vmatpush1.bf16.msra.mxu0 0
  %2540 = vmatprep.subr.bf16.mxu0 0
  %2541 = vmatpush1.bf16.msra.mxu0 0
  %2542 = vmatprep.subr.bf16.mxu0 0
  %2543 = vmatpush1.bf16.msra.mxu0 0
  %2544 = vmatprep.subr.bf16.mxu0 %v2174
  %2545 = vmatpush1.bf16.msra.mxu0 %v2173
  %2546 = vmatprep.subr.bf16.mxu0 %v2158
  %2547 = vmatpush1.bf16.msra.mxu0 %v2157
  %2548 = vmatprep.subr.bf16.mxu0 %v2142
  %2549 = vmatpush1.bf16.msra.mxu0 %v2141
  %2550 = vmatprep.subr.bf16.mxu0 %v2126
  %2551 = vmatpush1.bf16.msra.mxu0 %v2125
  %2552 = vmatprep.subr.bf16.mxu0 0
  %2553 = vmatpush2.bf16.msra.mxu0 0
  %2554 = vmatprep.subr.bf16.mxu0 0
  %2555 = vmatpush2.bf16.msra.mxu0 0
  %2556 = vmatprep.subr.bf16.mxu0 0
  %2557 = vmatpush2.bf16.msra.mxu0 0
  %2558 = vmatprep.subr.bf16.mxu0 0
  %2559 = vmatpush2.bf16.msra.mxu0 0
  %2560 = vmatprep.subr.bf16.mxu0 0
  %2561 = vmatpush2.bf16.msra.mxu0 0
  %2562 = vmatprep.subr.bf16.mxu0 0
  %2563 = vmatpush2.bf16.msra.mxu0 0
  %2564 = vmatprep.subr.bf16.mxu0 0
  %2565 = vmatpush2.bf16.msra.mxu0 0
  %2566 = vmatprep.subr.bf16.mxu0 0
  %2567 = vmatpush2.bf16.msra.mxu0 0
  %2568 = vmatprep.mubr.bf16.mxu0 0
  %2569 = vmatmul.mubr.bf16.gmra.mxu0 %v2213
  %v2570 = vpop.f32.mrf.mxu0
  %v2571 = vadd.f32 %v2184, %v2570
  %v2572 = vpop.f32.mrf.mxu0
  %v2573 = vadd.f32 %v2184, %v2572
  %v2574 = vpop.f32.mrf.mxu0
  %v2575 = vadd.f32 %v2189, %v2574
  %v2576 = vpop.f32.mrf.mxu0
  %v2577 = vadd.f32 %v2189, %v2576
  %2578 = vmatprep.mubr.bf16.mxu0 0
  %2579 = vmatmul.mubr.bf16.gmra.mxu0 %v2216
  %v2580 = vpop.f32.mrf.mxu0
  %v2581 = vadd.f32 %v2194, %v2580
  %v2582 = vpop.f32.mrf.mxu0
  %v2583 = vadd.f32 %v2194, %v2582
  %v2584 = vpop.f32.mrf.mxu0
  %v2585 = vadd.f32 %v2199, %v2584
  %v2586 = vpop.f32.mrf.mxu0
  %v2587 = vadd.f32 %v2199, %v2586
  %2588 = vdwg.mxu0
  %2589 = vmatprep.subr.bf16.mxu0 0
  %2590 = vmatpush1.bf16.msra.mxu0 0
  %2591 = vmatprep.subr.bf16.mxu0 0
  %2592 = vmatpush1.bf16.msra.mxu0 0
  %2593 = vmatprep.subr.bf16.mxu0 0
  %2594 = vmatpush1.bf16.msra.mxu0 0
  %2595 = vmatprep.subr.bf16.mxu0 0
  %2596 = vmatpush1.bf16.msra.mxu0 0
  %2597 = vmatprep.subr.bf16.mxu0 %v2176
  %2598 = vmatpush1.bf16.msra.mxu0 %v2175
  %2599 = vmatprep.subr.bf16.mxu0 %v2160
  %2600 = vmatpush1.bf16.msra.mxu0 %v2159
  %2601 = vmatprep.subr.bf16.mxu0 %v2144
  %2602 = vmatpush1.bf16.msra.mxu0 %v2143
  %2603 = vmatprep.subr.bf16.mxu0 %v2128
  %2604 = vmatpush1.bf16.msra.mxu0 %v2127
  %2605 = vmatprep.subr.bf16.mxu0 0
  %2606 = vmatpush2.bf16.msra.mxu0 0
  %2607 = vmatprep.subr.bf16.mxu0 0
  %2608 = vmatpush2.bf16.msra.mxu0 0
  %2609 = vmatprep.subr.bf16.mxu0 0
  %2610 = vmatpush2.bf16.msra.mxu0 0
  %2611 = vmatprep.subr.bf16.mxu0 0
  %2612 = vmatpush2.bf16.msra.mxu0 0
  %2613 = vmatprep.subr.bf16.mxu0 0
  %2614 = vmatpush2.bf16.msra.mxu0 0
  %2615 = vmatprep.subr.bf16.mxu0 0
  %2616 = vmatpush2.bf16.msra.mxu0 0
  %2617 = vmatprep.subr.bf16.mxu0 0
  %2618 = vmatpush2.bf16.msra.mxu0 0
  %2619 = vmatprep.subr.bf16.mxu0 0
  %2620 = vmatpush2.bf16.msra.mxu0 0
  %2621 = vmatprep.mubr.bf16.mxu0 0
  %2622 = vmatmul.mubr.bf16.gmra.mxu0 %v2213
  %v2623 = vpop.f32.mrf.mxu0
  %v2624 = vadd.f32 %v2184, %v2623
  %v2625 = vpop.f32.mrf.mxu0
  %v2626 = vadd.f32 %v2184, %v2625
  %v2627 = vpop.f32.mrf.mxu0
  %v2628 = vadd.f32 %v2189, %v2627
  %v2629 = vpop.f32.mrf.mxu0
  %v2630 = vadd.f32 %v2189, %v2629
  %2631 = vmatprep.mubr.bf16.mxu0 0
  %2632 = vmatmul.mubr.bf16.gmra.mxu0 %v2216
  %v2633 = vpop.f32.mrf.mxu0
  %v2634 = vadd.f32 %v2194, %v2633
  %v2635 = vpop.f32.mrf.mxu0
  %v2636 = vadd.f32 %v2194, %v2635
  %v2637 = vpop.f32.mrf.mxu0
  %v2638 = vadd.f32 %v2199, %v2637
  %v2639 = vpop.f32.mrf.mxu0
  %v2640 = vadd.f32 %v2199, %v2639
  %2641 = vdwg.mxu0
  %v2642 = vmax.f32 %v2253, 0.0
  %v2643 = vmax.f32 %v2255, 0.0
  %v2644 = vmax.f32 %v2306, 0.0
  %v2645 = vmax.f32 %v2308, 0.0
  %v2646 = vmax.f32 %v2359, 0.0
  %v2647 = vmax.f32 %v2361, 0.0
  %v2648 = vmax.f32 %v2412, 0.0
  %v2649 = vmax.f32 %v2414, 0.0
  %v2650 = vmax.f32 %v2465, 0.0
  %v2651 = vmax.f32 %v2467, 0.0
  %v2652 = vmax.f32 %v2518, 0.0
  %v2653 = vmax.f32 %v2520, 0.0
  %v2654 = vmax.f32 %v2571, 0.0
  %v2655 = vmax.f32 %v2573, 0.0
  %v2656 = vmax.f32 %v2624, 0.0
  %v2657 = vmax.f32 %v2626, 0.0
  %v2658 = vmax.f32 %v2257, 0.0
  %v2659 = vmax.f32 %v2259, 0.0
  %v2660 = vmax.f32 %v2310, 0.0
  %v2661 = vmax.f32 %v2312, 0.0
  %v2662 = vmax.f32 %v2363, 0.0
  %v2663 = vmax.f32 %v2365, 0.0
  %v2664 = vmax.f32 %v2416, 0.0
  %v2665 = vmax.f32 %v2418, 0.0
  %v2666 = vmax.f32 %v2469, 0.0
  %v2667 = vmax.f32 %v2471, 0.0
  %v2668 = vmax.f32 %v2522, 0.0
  %v2669 = vmax.f32 %v2524, 0.0
  %v2670 = vmax.f32 %v2575, 0.0
  %v2671 = vmax.f32 %v2577, 0.0
  %v2672 = vmax.f32 %v2628, 0.0
  %v2673 = vmax.f32 %v2630, 0.0
  %v2674 = vmax.f32 %v2263, 0.0
  %v2675 = vmax.f32 %v2265, 0.0
  %v2676 = vmax.f32 %v2316, 0.0
  %v2677 = vmax.f32 %v2318, 0.0
  %v2678 = vmax.f32 %v2369, 0.0
  %v2679 = vmax.f32 %v2371, 0.0
  %v2680 = vmax.f32 %v2422, 0.0
  %v2681 = vmax.f32 %v2424, 0.0
  %v2682 = vmax.f32 %v2475, 0.0
  %v2683 = vmax.f32 %v2477, 0.0
  %v2684 = vmax.f32 %v2528, 0.0
  %v2685 = vmax.f32 %v2530, 0.0
  %v2686 = vmax.f32 %v2581, 0.0
  %v2687 = vmax.f32 %v2583, 0.0
  %v2688 = vmax.f32 %v2634, 0.0
  %v2689 = vmax.f32 %v2636, 0.0
  %v2690 = vmax.f32 %v2267, 0.0
  %v2691 = vmax.f32 %v2269, 0.0
  %v2692 = vmax.f32 %v2320, 0.0
  %v2693 = vmax.f32 %v2322, 0.0
  %v2694 = vmax.f32 %v2373, 0.0
  %v2695 = vmax.f32 %v2375, 0.0
  %v2696 = vmax.f32 %v2426, 0.0
  %v2697 = vmax.f32 %v2428, 0.0
  %v2698 = vmax.f32 %v2479, 0.0
  %v2699 = vmax.f32 %v2481, 0.0
  %v2700 = vmax.f32 %v2532, 0.0
  %v2701 = vmax.f32 %v2534, 0.0
  %v2702 = vmax.f32 %v2585, 0.0
  %v2703 = vmax.f32 %v2587, 0.0
  %v2704 = vmax.f32 %v2638, 0.0
  %v2705 = vmax.f32 %v2640, 0.0
  %v2706 = vld [vmem:[%s5] sm:$0xff]
  %v2707 = vld [vmem:[%s5 + $0x8] sm:$0xff]
  %v2708 = vld [vmem:[%s5 + $0x10] sm:$0xff]
  %v2709 = vld [vmem:[%s5 + $0x18] sm:$0xff]
  %2711 = vset.pattern.permute.xlu0 0
  %2712 = vperm.xlu0 %2711, %v2706
  %v2713 = vpop.permute.xlu0 %2712
  %2716 = vset.pattern.permute.xlu0 0
  %2717 = vperm.xlu0 %2716, %v2707
  %v2718 = vpop.permute.xlu0 %2717
  %2721 = vset.pattern.permute.xlu0 0
  %2722 = vperm.xlu0 %2721, %v2708
  %v2723 = vpop.permute.xlu0 %2722
  %2726 = vset.pattern.permute.xlu0 0
  %2727 = vperm.xlu0 %2726, %v2709
  %v2728 = vpop.permute.xlu0 %2727
  %v2730 = vmul.f32 %v2642, %v2713
  %v2731 = vmul.f32 %v2643, %v2713
  %v2732 = vmul.f32 %v2644, %v2713
  %v2733 = vmul.f32 %v2645, %v2713
  %v2734 = vmul.f32 %v2646, %v2713
  %v2735 = vmul.f32 %v2647, %v2713
  %v2736 = vmul.f32 %v2648, %v2713
  %v2737 = vmul.f32 %v2649, %v2713
  %v2738 = vmul.f32 %v2650, %v2713
  %v2739 = vmul.f32 %v2651, %v2713
  %v2740 = vmul.f32 %v2652, %v2713
  %v2741 = vmul.f32 %v2653, %v2713
  %v2742 = vmul.f32 %v2654, %v2713
  %v2743 = vmul.f32 %v2655, %v2713
  %v2744 = vmul.f32 %v2656, %v2713
  %v2745 = vmul.f32 %v2657, %v2713
  %v2746 = vmul.f32 %v2658, %v2718
  %v2747 = vmul.f32 %v2659, %v2718
  %v2748 = vmul.f32 %v2660, %v2718
  %v2749 = vmul.f32 %v2661, %v2718
  %v2750 = vmul.f32 %v2662, %v2718
  %v2751 = vmul.f32 %v2663, %v2718
  %v2752 = vmul.f32 %v2664, %v2718
  %v2753 = vmul.f32 %v2665, %v2718
  %v2754 = vmul.f32 %v2666, %v2718
  %v2755 = vmul.f32 %v2667, %v2718
  %v2756 = vmul.f32 %v2668, %v2718
  %v2757 = vmul.f32 %v2669, %v2718
  %v2758 = vmul.f32 %v2670, %v2718
  %v2759 = vmul.f32 %v2671, %v2718
  %v2760 = vmul.f32 %v2672, %v2718
  %v2761 = vmul.f32 %v2673, %v2718
  %v2762 = vmul.f32 %v2674, %v2723
  %v2763 = vmul.f32 %v2675, %v2723
  %v2764 = vmul.f32 %v2676, %v2723
  %v2765 = vmul.f32 %v2677, %v2723
  %v2766 = vmul.f32 %v2678, %v2723
  %v2767 = vmul.f32 %v2679, %v2723
  %v2768 = vmul.f32 %v2680, %v2723
  %v2769 = vmul.f32 %v2681, %v2723
  %v2770 = vmul.f32 %v2682, %v2723
  %v2771 = vmul.f32 %v2683, %v2723
  %v2772 = vmul.f32 %v2684, %v2723
  %v2773 = vmul.f32 %v2685, %v2723
  %v2774 = vmul.f32 %v2686, %v2723
  %v2775 = vmul.f32 %v2687, %v2723
  %v2776 = vmul.f32 %v2688, %v2723
  %v2777 = vmul.f32 %v2689, %v2723
  %v2778 = vmul.f32 %v2690, %v2728
  %v2779 = vmul.f32 %v2691, %v2728
  %v2780 = vmul.f32 %v2692, %v2728
  %v2781 = vmul.f32 %v2693, %v2728
  %v2782 = vmul.f32 %v2694, %v2728
  %v2783 = vmul.f32 %v2695, %v2728
  %v2784 = vmul.f32 %v2696, %v2728
  %v2785 = vmul.f32 %v2697, %v2728
  %v2786 = vmul.f32 %v2698, %v2728
  %v2787 = vmul.f32 %v2699, %v2728
  %v2788 = vmul.f32 %v2700, %v2728
  %v2789 = vmul.f32 %v2701, %v2728
  %v2790 = vmul.f32 %v2702, %v2728
  %v2791 = vmul.f32 %v2703, %v2728
  %v2792 = vmul.f32 %v2704, %v2728
  %v2793 = vmul.f32 %v2705, %v2728
  %v2794 = vadd.f32 %v2730, %v2746
  %v2795 = vadd.f32 %v2794, %v2762
  %v2796 = vadd.f32 %v2795, %v2778
  %v2797 = vrot.slane %v2796, 4
  %v2798 = vadd.f32 %v2796, %v2797
  %v2799 = vrot.slane %v2798, 2
  %v2800 = vadd.f32 %v2798, %v2799
  %v2801 = vrot.slane %v2800, 1
  %v2802 = vadd.f32 %v2800, %v2801
  %v2803 = vadd.f32 %v2731, %v2747
  %v2804 = vadd.f32 %v2803, %v2763
  %v2805 = vadd.f32 %v2804, %v2779
  %v2806 = vrot.slane %v2805, 4
  %v2807 = vadd.f32 %v2805, %v2806
  %v2808 = vrot.slane %v2807, 2
  %v2809 = vadd.f32 %v2807, %v2808
  %v2810 = vrot.slane %v2809, 1
  %v2811 = vadd.f32 %v2809, %v2810
  %v2812 = vadd.f32 %v2732, %v2748
  %v2813 = vadd.f32 %v2812, %v2764
  %v2814 = vadd.f32 %v2813, %v2780
  %v2815 = vrot.slane %v2814, 4
  %v2816 = vadd.f32 %v2814, %v2815
  %v2817 = vrot.slane %v2816, 2
  %v2818 = vadd.f32 %v2816, %v2817
  %v2819 = vrot.slane %v2818, 1
  %v2820 = vadd.f32 %v2818, %v2819
  %v2821 = vadd.f32 %v2733, %v2749
  %v2822 = vadd.f32 %v2821, %v2765
  %v2823 = vadd.f32 %v2822, %v2781
  %v2824 = vrot.slane %v2823, 4
  %v2825 = vadd.f32 %v2823, %v2824
  %v2826 = vrot.slane %v2825, 2
  %v2827 = vadd.f32 %v2825, %v2826
  %v2828 = vrot.slane %v2827, 1
  %v2829 = vadd.f32 %v2827, %v2828
  %v2830 = vadd.f32 %v2734, %v2750
  %v2831 = vadd.f32 %v2830, %v2766
  %v2832 = vadd.f32 %v2831, %v2782
  %v2833 = vrot.slane %v2832, 4
  %v2834 = vadd.f32 %v2832, %v2833
  %v2835 = vrot.slane %v2834, 2
  %v2836 = vadd.f32 %v2834, %v2835
  %v2837 = vrot.slane %v2836, 1
  %v2838 = vadd.f32 %v2836, %v2837
  %v2839 = vadd.f32 %v2735, %v2751
  %v2840 = vadd.f32 %v2839, %v2767
  %v2841 = vadd.f32 %v2840, %v2783
  %v2842 = vrot.slane %v2841, 4
  %v2843 = vadd.f32 %v2841, %v2842
  %v2844 = vrot.slane %v2843, 2
  %v2845 = vadd.f32 %v2843, %v2844
  %v2846 = vrot.slane %v2845, 1
  %v2847 = vadd.f32 %v2845, %v2846
  %v2848 = vadd.f32 %v2736, %v2752
  %v2849 = vadd.f32 %v2848, %v2768
  %v2850 = vadd.f32 %v2849, %v2784
  %v2851 = vrot.slane %v2850, 4
  %v2852 = vadd.f32 %v2850, %v2851
  %v2853 = vrot.slane %v2852, 2
  %v2854 = vadd.f32 %v2852, %v2853
  %v2855 = vrot.slane %v2854, 1
  %v2856 = vadd.f32 %v2854, %v2855
  %v2857 = vadd.f32 %v2737, %v2753
  %v2858 = vadd.f32 %v2857, %v2769
  %v2859 = vadd.f32 %v2858, %v2785
  %v2860 = vrot.slane %v2859, 4
  %v2861 = vadd.f32 %v2859, %v2860
  %v2862 = vrot.slane %v2861, 2
  %v2863 = vadd.f32 %v2861, %v2862
  %v2864 = vrot.slane %v2863, 1
  %v2865 = vadd.f32 %v2863, %v2864
  %v2866 = vadd.f32 %v2738, %v2754
  %v2867 = vadd.f32 %v2866, %v2770
  %v2868 = vadd.f32 %v2867, %v2786
  %v2869 = vrot.slane %v2868, 4
  %v2870 = vadd.f32 %v2868, %v2869
  %v2871 = vrot.slane %v2870, 2
  %v2872 = vadd.f32 %v2870, %v2871
  %v2873 = vrot.slane %v2872, 1
  %v2874 = vadd.f32 %v2872, %v2873
  %v2875 = vadd.f32 %v2739, %v2755
  %v2876 = vadd.f32 %v2875, %v2771
  %v2877 = vadd.f32 %v2876, %v2787
  %v2878 = vrot.slane %v2877, 4
  %v2879 = vadd.f32 %v2877, %v2878
  %v2880 = vrot.slane %v2879, 2
  %v2881 = vadd.f32 %v2879, %v2880
  %v2882 = vrot.slane %v2881, 1
  %v2883 = vadd.f32 %v2881, %v2882
  %v2884 = vadd.f32 %v2740, %v2756
  %v2885 = vadd.f32 %v2884, %v2772
  %v2886 = vadd.f32 %v2885, %v2788
  %v2887 = vrot.slane %v2886, 4
  %v2888 = vadd.f32 %v2886, %v2887
  %v2889 = vrot.slane %v2888, 2
  %v2890 = vadd.f32 %v2888, %v2889
  %v2891 = vrot.slane %v2890, 1
  %v2892 = vadd.f32 %v2890, %v2891
  %v2893 = vadd.f32 %v2741, %v2757
  %v2894 = vadd.f32 %v2893, %v2773
  %v2895 = vadd.f32 %v2894, %v2789
  %v2896 = vrot.slane %v2895, 4
  %v2897 = vadd.f32 %v2895, %v2896
  %v2898 = vrot.slane %v2897, 2
  %v2899 = vadd.f32 %v2897, %v2898
  %v2900 = vrot.slane %v2899, 1
  %v2901 = vadd.f32 %v2899, %v2900
  %v2902 = vadd.f32 %v2742, %v2758
  %v2903 = vadd.f32 %v2902, %v2774
  %v2904 = vadd.f32 %v2903, %v2790
  %v2905 = vrot.slane %v2904, 4
  %v2906 = vadd.f32 %v2904, %v2905
  %v2907 = vrot.slane %v2906, 2
  %v2908 = vadd.f32 %v2906, %v2907
  %v2909 = vrot.slane %v2908, 1
  %v2910 = vadd.f32 %v2908, %v2909
  %v2911 = vadd.f32 %v2743, %v2759
  %v2912 = vadd.f32 %v2911, %v2775
  %v2913 = vadd.f32 %v2912, %v2791
  %v2914 = vrot.slane %v2913, 4
  %v2915 = vadd.f32 %v2913, %v2914
  %v2916 = vrot.slane %v2915, 2
  %v2917 = vadd.f32 %v2915, %v2916
  %v2918 = vrot.slane %v2917, 1
  %v2919 = vadd.f32 %v2917, %v2918
  %v2920 = vadd.f32 %v2744, %v2760
  %v2921 = vadd.f32 %v2920, %v2776
  %v2922 = vadd.f32 %v2921, %v2792
  %v2923 = vrot.slane %v2922, 4
  %v2924 = vadd.f32 %v2922, %v2923
  %v2925 = vrot.slane %v2924, 2
  %v2926 = vadd.f32 %v2924, %v2925
  %v2927 = vrot.slane %v2926, 1
  %v2928 = vadd.f32 %v2926, %v2927
  %v2929 = vadd.f32 %v2745, %v2761
  %v2930 = vadd.f32 %v2929, %v2777
  %v2931 = vadd.f32 %v2930, %v2793
  %v2932 = vrot.slane %v2931, 4
  %v2933 = vadd.f32 %v2931, %v2932
  %v2934 = vrot.slane %v2933, 2
  %v2935 = vadd.f32 %v2933, %v2934
  %v2936 = vrot.slane %v2935, 1
  %v2937 = vadd.f32 %v2935, %v2936
  %s2938 = sld [smem:[#allocation2]]
  %v2939 = vstv %s2938
  %v2940 = vadd.f32 %v2802, %v2939
  %v2941 = vadd.f32 %v2811, %v2939
  %v2942 = vadd.f32 %v2820, %v2939
  %v2943 = vadd.f32 %v2829, %v2939
  %v2944 = vadd.f32 %v2838, %v2939
  %v2945 = vadd.f32 %v2847, %v2939
  %v2946 = vadd.f32 %v2856, %v2939
  %v2947 = vadd.f32 %v2865, %v2939
  %v2948 = vadd.f32 %v2874, %v2939
  %v2949 = vadd.f32 %v2883, %v2939
  %v2950 = vadd.f32 %v2892, %v2939
  %v2951 = vadd.f32 %v2901, %v2939
  %v2952 = vadd.f32 %v2910, %v2939
  %v2953 = vadd.f32 %v2919, %v2939
  %v2954 = vadd.f32 %v2928, %v2939
  %v2955 = vadd.f32 %v2937, %v2939
  %v2956 = vxor.u32 %v2940, 2147483648
  %v2957 = vxor.u32 %v2941, 2147483648
  %v2958 = vxor.u32 %v2942, 2147483648
  %v2959 = vxor.u32 %v2943, 2147483648
  %v2960 = vxor.u32 %v2944, 2147483648
  %v2961 = vxor.u32 %v2945, 2147483648
  %v2962 = vxor.u32 %v2946, 2147483648
  %v2963 = vxor.u32 %v2947, 2147483648
  %v2964 = vxor.u32 %v2948, 2147483648
  %v2965 = vxor.u32 %v2949, 2147483648
  %v2966 = vxor.u32 %v2950, 2147483648
  %v2967 = vxor.u32 %v2951, 2147483648
  %v2968 = vxor.u32 %v2952, 2147483648
  %v2969 = vxor.u32 %v2953, 2147483648
  %v2970 = vxor.u32 %v2954, 2147483648
  %v2971 = vxor.u32 %v2955, 2147483648
  %v2972 = vmul.f32 %v2956, 1.442695
  %v2973 = vpow.pop %v2972
  %v2974 = vmul.f32 %v2957, 1.442695
  %v2975 = vpow.pop %v2974
  %v2976 = vmul.f32 %v2958, 1.442695
  %v2977 = vpow.pop %v2976
  %v2978 = vmul.f32 %v2959, 1.442695
  %v2979 = vpow.pop %v2978
  %v2980 = vmul.f32 %v2960, 1.442695
  %v2981 = vpow.pop %v2980
  %v2982 = vmul.f32 %v2961, 1.442695
  %v2983 = vpow.pop %v2982
  %v2984 = vmul.f32 %v2962, 1.442695
  %v2985 = vpow.pop %v2984
  %v2986 = vmul.f32 %v2963, 1.442695
  %v2987 = vpow.pop %v2986
  %v2988 = vmul.f32 %v2964, 1.442695
  %v2989 = vpow.pop %v2988
  %v2990 = vmul.f32 %v2965, 1.442695
  %v2991 = vpow.pop %v2990
  %v2992 = vmul.f32 %v2966, 1.442695
  %v2993 = vpow.pop %v2992
  %v2994 = vmul.f32 %v2967, 1.442695
  %v2995 = vpow.pop %v2994
  %v2996 = vmul.f32 %v2968, 1.442695
  %v2997 = vpow.pop %v2996
  %v2998 = vmul.f32 %v2969, 1.442695
  %v2999 = vpow.pop %v2998
  %v3000 = vmul.f32 %v2970, 1.442695
  %v3001 = vpow.pop %v3000
  %v3002 = vmul.f32 %v2971, 1.442695
  %v3003 = vpow.pop %v3002
  %v3004 = vadd.f32 %v2973, 1.0
  %v3005 = vadd.f32 %v2975, 1.0
  %v3006 = vadd.f32 %v2977, 1.0
  %v3007 = vadd.f32 %v2979, 1.0
  %v3008 = vadd.f32 %v2981, 1.0
  %v3009 = vadd.f32 %v2983, 1.0
  %v3010 = vadd.f32 %v2985, 1.0
  %v3011 = vadd.f32 %v2987, 1.0
  %v3012 = vadd.f32 %v2989, 1.0
  %v3013 = vadd.f32 %v2991, 1.0
  %v3014 = vadd.f32 %v2993, 1.0
  %v3015 = vadd.f32 %v2995, 1.0
  %v3016 = vadd.f32 %v2997, 1.0
  %v3017 = vadd.f32 %v2999, 1.0
  %v3018 = vadd.f32 %v3001, 1.0
  %v3019 = vadd.f32 %v3003, 1.0
  %v3020 = vrcp.pop %v3004
  %v3021 = vmul.f32 1.0, %v3020
  %v3022 = vrcp.pop %v3005
  %v3023 = vmul.f32 1.0, %v3022
  %v3024 = vrcp.pop %v3006
  %v3025 = vmul.f32 1.0, %v3024
  %v3026 = vrcp.pop %v3007
  %v3027 = vmul.f32 1.0, %v3026
  %v3028 = vrcp.pop %v3008
  %v3029 = vmul.f32 1.0, %v3028
  %v3030 = vrcp.pop %v3009
  %v3031 = vmul.f32 1.0, %v3030
  %v3032 = vrcp.pop %v3010
  %v3033 = vmul.f32 1.0, %v3032
  %v3034 = vrcp.pop %v3011
  %v3035 = vmul.f32 1.0, %v3034
  %v3036 = vrcp.pop %v3012
  %v3037 = vmul.f32 1.0, %v3036
  %v3038 = vrcp.pop %v3013
  %v3039 = vmul.f32 1.0, %v3038
  %v3040 = vrcp.pop %v3014
  %v3041 = vmul.f32 1.0, %v3040
  %v3042 = vrcp.pop %v3015
  %v3043 = vmul.f32 1.0, %v3042
  %v3044 = vrcp.pop %v3016
  %v3045 = vmul.f32 1.0, %v3044
  %v3046 = vrcp.pop %v3017
  %v3047 = vmul.f32 1.0, %v3046
  %v3048 = vrcp.pop %v3018
  %v3049 = vmul.f32 1.0, %v3048
  %v3050 = vrcp.pop %v3019
  %v3051 = vmul.f32 1.0, %v3050
  %v3068 = vcombine.low %v3021, %v3023
  %v3069 = vcombine.low %v3025, %v3027
  %v3070 = vcombine.low %v3029, %v3031
  %v3071 = vcombine.low %v3033, %v3035
  %v3073 = vunpack.c.l.s4 1966171168
  %v3074 = vunpack.c.0.s8 %v3073
  %v3075 = vlaneseq
  %v3076 = vshrl.u32 %v3075, 7
  %v3077 = vsub.s32 %v3074, %v3076
  %v3078 = vrot.slane %v3068, %v3077
  %v3080 = vunpack.c.l.s4 1966171168
  %v3081 = vunpack.c.0.s8 %v3080
  %v3082 = vlaneseq
  %v3083 = vshrl.u32 %v3082, 7
  %v3084 = vsub.s32 %v3081, %v3083
  %v3085 = vrot.slane %v3069, %v3084
  %v3087 = vunpack.c.l.s4 1966171168
  %v3088 = vunpack.c.0.s8 %v3087
  %v3089 = vlaneseq
  %v3090 = vshrl.u32 %v3089, 7
  %v3091 = vsub.s32 %v3088, %v3090
  %v3092 = vrot.slane %v3070, %v3091
  %v3094 = vunpack.c.l.s4 1966171168
  %v3095 = vunpack.c.0.s8 %v3094
  %v3096 = vlaneseq
  %v3097 = vshrl.u32 %v3096, 7
  %v3098 = vsub.s32 %v3095, %v3097
  %v3099 = vrot.slane %v3071, %v3098
  %v3100 = vcombine.low %v3078, %v3085
  %v3101 = vcombine.low %v3092, %v3099
  %v3103 = vunpack.c.l.s4 1966171168
  %v3104 = vunpack.c.0.s8 %v3103
  %v3105 = vlaneseq
  %v3106 = vshrl.u32 %v3105, 7
  %v3107 = vsub.s32 %v3104, %v3106
  %v3108 = vrot.slane %v3100, %v3107
  %v3110 = vunpack.c.l.s4 1966171168
  %v3111 = vunpack.c.0.s8 %v3110
  %v3112 = vlaneseq
  %v3113 = vshrl.u32 %v3112, 7
  %v3114 = vsub.s32 %v3111, %v3113
  %v3115 = vrot.slane %v3101, %v3114
  %v3116 = vcombine.low %v3108, %v3115
  %v3117 = vcombine.low %v3037, %v3039
  %v3118 = vcombine.low %v3041, %v3043
  %v3119 = vcombine.low %v3045, %v3047
  %v3120 = vcombine.low %v3049, %v3051
  %v3122 = vunpack.c.l.s4 1966171168
  %v3123 = vunpack.c.0.s8 %v3122
  %v3124 = vlaneseq
  %v3125 = vshrl.u32 %v3124, 7
  %v3126 = vsub.s32 %v3123, %v3125
  %v3127 = vrot.slane %v3117, %v3126
  %v3129 = vunpack.c.l.s4 1966171168
  %v3130 = vunpack.c.0.s8 %v3129
  %v3131 = vlaneseq
  %v3132 = vshrl.u32 %v3131, 7
  %v3133 = vsub.s32 %v3130, %v3132
  %v3134 = vrot.slane %v3118, %v3133
  %v3136 = vunpack.c.l.s4 1966171168
  %v3137 = vunpack.c.0.s8 %v3136
  %v3138 = vlaneseq
  %v3139 = vshrl.u32 %v3138, 7
  %v3140 = vsub.s32 %v3137, %v3139
  %v3141 = vrot.slane %v3119, %v3140
  %v3143 = vunpack.c.l.s4 1966171168
  %v3144 = vunpack.c.0.s8 %v3143
  %v3145 = vlaneseq
  %v3146 = vshrl.u32 %v3145, 7
  %v3147 = vsub.s32 %v3144, %v3146
  %v3148 = vrot.slane %v3120, %v3147
  %v3149 = vcombine.low %v3127, %v3134
  %v3150 = vcombine.low %v3141, %v3148
  %v3152 = vunpack.c.l.s4 1966171168
  %v3153 = vunpack.c.0.s8 %v3152
  %v3154 = vlaneseq
  %v3155 = vshrl.u32 %v3154, 7
  %v3156 = vsub.s32 %v3153, %v3155
  %v3157 = vrot.slane %v3149, %v3156
  %v3159 = vunpack.c.l.s4 1966171168
  %v3160 = vunpack.c.0.s8 %v3159
  %v3161 = vlaneseq
  %v3162 = vshrl.u32 %v3161, 7
  %v3163 = vsub.s32 %v3160, %v3162
  %v3164 = vrot.slane %v3150, %v3163
  %v3165 = vcombine.low %v3157, %v3164
  %3168 = vst [vmem:[%s7] sm:$0xff] %v3116
  %3169 = vst [vmem:[%s7 + $0x8] sm:$0xff] %v3165
  // Predicated region
  $region30: #{churn_predict_mlp.1} parent=0 // pred_check
    _
  $region31: #{churn_predict_mlp.1} parent=0 // pred_check_branch
    %3171 = sbr.rel (0) target = $region33
  $region32: #{churn_predict_mlp.1} parent=0 // pred_region
    _
  $region33: #{churn_predict_mlp.1} parent=0 // pred_fallthru
    _
  // Predicated region
  $region34: #{churn_predict_mlp.1} parent=0 // pred_check
    _
  $region35: #{churn_predict_mlp.1} parent=0 // pred_check_branch
    %3173 = sbr.rel (0) target = $region37
  $region36: #{churn_predict_mlp.1} parent=0 // pred_region
    _
  $region37: #{churn_predict_mlp.1} parent=0 // pred_fallthru
    _

</llo_original>
